<compile_context>
chip_gen: v7x
topology: tpu7x:2x2x1
jax: 0.10.0
libtpu: 0.0.40
codegen_flags: <defaults>
</compile_context>

<pallas_src>
import functools

import jax
import jax.numpy as jnp
from jax import lax
from jax.experimental import pallas as pl
from jax.experimental.pallas import tpu as pltpu


# ---------------------------------------------------------------------------------
# device / tiling helpers
# ---------------------------------------------------------------------------------
def _largest_divisor_leq(n, cap):
    for d in range(min(n, cap), 0, -1):
        if n % d == 0:
            return d
    return 1


def _vmem_capacity_bytes():
    try:
        return int(pltpu.get_tpu_info().vmem_capacity_bytes)
    except Exception:
        return 64 * 1024 * 1024          # conservative (v7x-sized) fallback


def _num_tensorcores():
    # v5e/v6e expose 1 TensorCore per chip; v4/v5p/v7x megacore parts expose 2.
    try:
        kind = jax.devices()[0].device_kind.lower()
    except Exception:
        return 1
    if any(t in kind for t in ("v5e", "v5 lite", "v5lite", "v6e", "v6 lite", "v6lite")):
        return 1
    if any(t in kind for t in ("v7", "7x", "v5p", "v4")):
        return 2
    return 1


def _pick_batch_tile(B):
    # Only split the embarrassingly-parallel batch axis when two TensorCores can
    # actually pick up the halves (v7x / megacore).  On 1-TC v5e/v6e the split
    # just doubles grid overhead and halves the M of every h @ W_hh matmul.
    # B % 32 keeps tile_b a multiple of 16 (bf16 sublane packing of cols blocks).
    if _num_tensorcores() >= 2 and B % 32 == 0:
        return B // 2
    return B


def _pick_chunk(n, cap=16):
    """Timesteps per grid step along a length-n serial axis -> (chunk, padded_n)."""
    cap = max(1, min(cap, 16))
    if n <= cap:
        return n, n
    d = _largest_divisor_leq(n, cap)
    if d >= 4:
        return d, n
    # Awkward n (e.g. a prime > cap): pad up to a multiple of cap; padded steps
    # are masked out of the recurrence / running max inside the kernels.
    return cap, ((n + cap - 1) // cap) * cap


def _pick_row_tile(N, L, KD, G):
    # VMEM-budget-aware im2col row tile for the (multi-layer) conv kernel:
    # double-buffered bf16 cols tile + f32 xg tile against ~1/4 of physical VMEM.
    budget = _vmem_capacity_bytes() // 4
    per_row = 2 * L * (KD * 2 + G * 4)
    cap = max(1, min(N, 1024, budget // max(per_row, 1)))
    return _largest_divisor_leq(N, cap)


def _vmem_limit():
    return int(min(_vmem_capacity_bytes() // 2, 96 * 1024 * 1024))


def _reorder_gates(w):
    """Reorder torch LSTM gate blocks (i, f, g, o) -> (i, f, o, g) on the last axis."""
    H = w.shape[-1] // 4
    return jnp.concatenate([w[..., :2 * H], w[..., 3 * H:], w[..., 2 * H:3 * H]],
                           axis=-1)


# ---------------------------------------------------------------------------------
# shared LSTM gate step (gates packed i, f, o, g: one sigmoid slab + one tanh)
# ---------------------------------------------------------------------------------
def _lstm_gate_step(xg_t, h, c, whh_bf16, H):
    gates = xg_t + jnp.dot(h.astype(jnp.bfloat16), whh_bf16,
                           preferred_element_type=jnp.float32)
    sig = jax.nn.sigmoid(gates[:, :3 * H])
    g = jnp.tanh(gates[:, 3 * H:])
    i = sig[:, 0 * H:1 * H]
    f = sig[:, 1 * H:2 * H]
    o = sig[:, 2 * H:3 * H]
    c_new = f * c + i * g
    h_new = o * jnp.tanh(c_new)
    return h_new, c_new


# ---------------------------------------------------------------------------------
# Fused kernel (1-layer LSTM): conv + ReLU + input proj + recurrence + pool + head
# ---------------------------------------------------------------------------------
def _fused_clstm_kernel(col_ref, wc_ref, bc_ref, wih_ref, bl_ref, whh_ref,
                        w1_ref, b1_ref, w2_ref, b2_ref, o_ref,
                        h_scr, c_scr, m_scr, xg_scr, *, CH, H, n_real, n_pad):
    j = pl.program_id(1)       # conv branch (pseudo-time major)
    nc = pl.program_id(2)      # time-chunk within the branch

    @pl.when((j == 0) & (nc == 0))
    def _():
        h_scr[...] = jnp.zeros_like(h_scr)
        c_scr[...] = jnp.zeros_like(c_scr)
        m_scr[...] = jnp.full(m_scr.shape, -jnp.inf, jnp.float32)

    # Conv (single im2col matmul) + ReLU + LSTM input projection for the whole
    # chunk; xg lives only in VMEM scratch (no HBM round-trip).
    ch, tb, kd = col_ref.shape
    G = xg_scr.shape[-1]
    cols = col_ref[...].reshape(ch * tb, kd)                                 # bf16
    conv = jnp.dot(cols, wc_ref[0], preferred_element_type=jnp.float32) + bc_ref[0]
    act = jnp.maximum(conv, 0.0).astype(jnp.bfloat16)                        # ReLU
    xg = jnp.dot(act, wih_ref[...], preferred_element_type=jnp.float32) + bl_ref[...]
    xg_scr[...] = xg.reshape(ch, tb, G)

    whh = whh_ref[...]

    def step(s, carry):
        h, c, m = carry
        h_n, c_n = _lstm_gate_step(xg_scr[s], h, c, whh, H)
        if n_pad != n_real:                     # static: only traced when padded
            valid = (nc * CH + s) < n_real
            m = jnp.where(valid, jnp.maximum(m, h_n), m)
            h_n = jnp.where(valid, h_n, h)
            c_n = jnp.where(valid, c_n, c)
        else:
            m = jnp.maximum(m, h_n)             # running max_pool1d over pseudo-time
        return h_n, c_n, m

    h, c, m = lax.fori_loop(0, CH, step, (h_scr[...], c_scr[...], m_scr[...]),
                            unroll=True)
    h_scr[...], c_scr[...], m_scr[...] = h, c, m

    @pl.when((j == pl.num_programs(1) - 1) & (nc == pl.num_programs(2) - 1))
    def _():
        z = jnp.dot(jnp.tanh(m).astype(jnp.bfloat16), w1_ref[...],
                    preferred_element_type=jnp.float32) + b1_ref[...]
        z = jnp.dot(jnp.tanh(z).astype(jnp.bfloat16), w2_ref[...],
                    preferred_element_type=jnp.float32) + b2_ref[...]
        o_ref[...] = z


def clstm_fused(cols, wc, bc, wih, bl, whh, w1, b1, w2, b2, *,
                chunk, tile_b, n_real, n_pad, H):
    _, L, KD = cols.shape
    nK, _, Dout = wc.shape
    G = wih.shape[1]
    H2 = w1.shape[1]
    C = w2.shape[1]
    B = L
    return pl.pallas_call(
        functools.partial(_fused_clstm_kernel, CH=chunk, H=H,
                          n_real=n_real, n_pad=n_pad),
        out_shape=jax.ShapeDtypeStruct((B, C), jnp.float32),
        grid=(B // tile_b, nK, n_pad // chunk),
        in_specs=[
            pl.BlockSpec((chunk, tile_b, KD), lambda bt, j, nc: (nc, bt, 0)),
            pl.BlockSpec((1, KD, Dout), lambda bt, j, nc: (j, 0, 0)),
            pl.BlockSpec((1, 1, Dout), lambda bt, j, nc: (j, 0, 0)),
            pl.BlockSpec((Dout, G), lambda bt, j, nc: (0, 0)),
            pl.BlockSpec((1, G), lambda bt, j, nc: (0, 0)),
            pl.BlockSpec((H, G), lambda bt, j, nc: (0, 0)),
            pl.BlockSpec((H, H2), lambda bt, j, nc: (0, 0)),
            pl.BlockSpec((1, H2), lambda bt, j, nc: (0, 0)),
            pl.BlockSpec((H2, C), lambda bt, j, nc: (0, 0)),
            pl.BlockSpec((1, C), lambda bt, j, nc: (0, 0)),
        ],
        out_specs=pl.BlockSpec((tile_b, C), lambda bt, j, nc: (bt, 0)),
        scratch_shapes=[pltpu.VMEM((tile_b, H), jnp.float32),
                        pltpu.VMEM((tile_b, H), jnp.float32),
                        pltpu.VMEM((tile_b, H), jnp.float32),
                        pltpu.VMEM((chunk, tile_b, G), jnp.float32)],
        compiler_params=pltpu.CompilerParams(
            dimension_semantics=("parallel", "arbitrary", "arbitrary"),
            vmem_limit_bytes=_vmem_limit()),
    )(cols, wc, bc, wih, bl, whh, w1, b1, w2, b2)


# ---------------------------------------------------------------------------------
# Multi-layer path, kernel A: fused im2col conv + ReLU + layer-0 input projection
# ---------------------------------------------------------------------------------
def _conv_lstm_in_kernel(col_ref, wc_ref, bc_ref, wih_ref, bl_ref, o_ref):
    tn, L, kd = col_ref.shape
    g = o_ref.shape[2]
    cols = col_ref[...].reshape(tn * L, kd)                                  # bf16
    conv = jnp.dot(cols, wc_ref[0], preferred_element_type=jnp.float32) + bc_ref[0]
    act = jnp.maximum(conv, 0.0).astype(jnp.bfloat16)                        # ReLU
    xg = jnp.dot(act, wih_ref[...], preferred_element_type=jnp.float32) + bl_ref[...]
    o_ref[...] = xg.reshape(tn, L, g)


def conv_lstm_in(cols, wc, bc, wih, bl, *, tile_n):
    N, L, KD = cols.shape
    nK, _, Dout = wc.shape
    G = wih.shape[1]
    nb_tiles = N // tile_n
    return pl.pallas_call(
        _conv_lstm_in_kernel,
        out_shape=jax.ShapeDtypeStruct((nK * N, L, G), jnp.float32),
        grid=(nK, nb_tiles),
        in_specs=[
            pl.BlockSpec((tile_n, L, KD), lambda j, nb: (nb, 0, 0)),
            pl.BlockSpec((1, KD, Dout), lambda j, nb: (j, 0, 0)),
            pl.BlockSpec((1, 1, Dout), lambda j, nb: (j, 0, 0)),
            pl.BlockSpec((Dout, G), lambda j, nb: (0, 0)),
            pl.BlockSpec((1, G), lambda j, nb: (0, 0)),
        ],
        out_specs=pl.BlockSpec((tile_n, L, G),
                               lambda j, nb: (j * nb_tiles + nb, 0, 0)),
        compiler_params=pltpu.CompilerParams(
            dimension_semantics=("parallel", "parallel"),
            vmem_limit_bytes=_vmem_limit()),
    )(cols, wc, bc, wih, bl)


# ---------------------------------------------------------------------------------
# Multi-layer path, kernel B: full-sequence recurrence (non-final layers)
# ---------------------------------------------------------------------------------
def _lstm_seq_kernel(xg_ref, whh_ref, o_ref, h_scr, c_scr, *, CH, H):
    tc = pl.program_id(1)

    @pl.when(tc == 0)
    def _():
        h_scr[...] = jnp.zeros_like(h_scr)
        c_scr[...] = jnp.zeros_like(c_scr)

    whh = whh_ref[...]

    def step(s, carry):
        h, c = carry
        h, c = _lstm_gate_step(xg_ref[s], h, c, whh, H)
        o_ref[s] = h
        return h, c

    h, c = lax.fori_loop(0, CH, step, (h_scr[...], c_scr[...]), unroll=True)
    h_scr[...], c_scr[...] = h, c


def lstm_seq(xg, whh, *, chunk, tile_b):
    T, B, G = xg.shape
    H = whh.shape[0]
    return pl.pallas_call(
        functools.partial(_lstm_seq_kernel, CH=chunk, H=H),
        out_shape=jax.ShapeDtypeStruct((T, B, H), jnp.float32),
        grid=(B // tile_b, T // chunk),
        in_specs=[
            pl.BlockSpec((chunk, tile_b, G), lambda bt, tc: (tc, bt, 0)),
            pl.BlockSpec((H, G), lambda bt, tc: (0, 0)),
        ],
        out_specs=pl.BlockSpec((chunk, tile_b, H), lambda bt, tc: (tc, bt, 0)),
        scratch_shapes=[pltpu.VMEM((tile_b, H), jnp.float32),
                        pltpu.VMEM((tile_b, H), jnp.float32)],
        compiler_params=pltpu.CompilerParams(
            dimension_semantics=("parallel", "arbitrary")),
    )(xg, whh)


# ---------------------------------------------------------------------------------
# Multi-layer path, kernel C: grid-parallel input projection for layers >= 2
# ---------------------------------------------------------------------------------
def _lstm_in_proj_kernel(h_ref, wih_ref, b_ref, o_ref):
    ct, bb, H = h_ref.shape
    g = o_ref.shape[2]
    x = h_ref[...].reshape(ct * bb, H).astype(jnp.bfloat16)
    y = jnp.dot(x, wih_ref[...], preferred_element_type=jnp.float32) + b_ref[...]
    o_ref[...] = y.reshape(ct, bb, g)


def lstm_in_proj(h_seq, wih, b, *, chunk):
    T, B, H = h_seq.shape
    G = wih.shape[1]
    return pl.pallas_call(
        _lstm_in_proj_kernel,
        out_shape=jax.ShapeDtypeStruct((T, B, G), jnp.float32),
        grid=(T // chunk,),
        in_specs=[
            pl.BlockSpec((chunk, B, H), lambda t: (t, 0, 0)),
            pl.BlockSpec((H, G), lambda t: (0, 0)),
            pl.BlockSpec((1, G), lambda t: (0, 0)),
        ],
        out_specs=pl.BlockSpec((chunk, B, G), lambda t: (t, 0, 0)),
        compiler_params=pltpu.CompilerParams(dimension_semantics=("parallel",)),
    )(h_seq, wih, b)


# ---------------------------------------------------------------------------------
# Multi-layer path, kernel D: final layer recurrence + max-pool + MLP head
# ---------------------------------------------------------------------------------
def _lstm_head_kernel(xg_ref, whh_ref, w1_ref, b1_ref, w2_ref, b2_ref, o_ref,
                      h_scr, c_scr, m_scr, *, CH, H, t_real, t_pad):
    tc = pl.program_id(1)

    @pl.when(tc == 0)
    def _():
        h_scr[...] = jnp.zeros_like(h_scr)
        c_scr[...] = jnp.zeros_like(c_scr)
        m_scr[...] = jnp.full(m_scr.shape, -jnp.inf, jnp.float32)

    whh = whh_ref[...]

    def step(s, carry):
        h, c, m = carry
        h, c = _lstm_gate_step(xg_ref[s], h, c, whh, H)
        if t_pad != t_real:                     # static: only traced when padded
            valid = (tc * CH + s) < t_real
            m = jnp.where(valid, jnp.maximum(m, h), m)
        else:
            m = jnp.maximum(m, h)
        return h, c, m

    h, c, m = lax.fori_loop(0, CH, step,
                            (h_scr[...], c_scr[...], m_scr[...]), unroll=True)
    h_scr[...], c_scr[...], m_scr[...] = h, c, m

    @pl.when(tc == pl.num_programs(1) - 1)
    def _():
        z = jnp.dot(jnp.tanh(m).astype(jnp.bfloat16), w1_ref[...],
                    preferred_element_type=jnp.float32) + b1_ref[...]
        z = jnp.dot(jnp.tanh(z).astype(jnp.bfloat16), w2_ref[...],
                    preferred_element_type=jnp.float32) + b2_ref[...]
        o_ref[...] = z


def lstm_head(xg, whh, w1, b1, w2, b2, *, chunk, tile_b, t_real, t_pad):
    T, B, G = xg.shape
    H = whh.shape[0]
    H2 = w1.shape[1]
    C = w2.shape[1]
    return pl.pallas_call(
        functools.partial(_lstm_head_kernel, CH=chunk, H=H,
                          t_real=t_real, t_pad=t_pad),
        out_shape=jax.ShapeDtypeStruct((B, C), jnp.float32),
        grid=(B // tile_b, T // chunk),
        in_specs=[
            pl.BlockSpec((chunk, tile_b, G), lambda bt, tc: (tc, bt, 0)),
            pl.BlockSpec((H, G), lambda bt, tc: (0, 0)),
            pl.BlockSpec((H, H2), lambda bt, tc: (0, 0)),
            pl.BlockSpec((1, H2), lambda bt, tc: (0, 0)),
            pl.BlockSpec((H2, C), lambda bt, tc: (0, 0)),
            pl.BlockSpec((1, C), lambda bt, tc: (0, 0)),
        ],
        out_specs=pl.BlockSpec((tile_b, C), lambda bt, tc: (bt, 0)),
        scratch_shapes=[pltpu.VMEM((tile_b, H), jnp.float32),
                        pltpu.VMEM((tile_b, H), jnp.float32),
                        pltpu.VMEM((tile_b, H), jnp.float32)],
        compiler_params=pltpu.CompilerParams(
            dimension_semantics=("parallel", "arbitrary")),
    )(xg, whh, w1, b1, w2, b2)


# ---------------------------------------------------------------------------------
# Full forward pass (glue in plain JAX, hot paths in Pallas)
# ---------------------------------------------------------------------------------
def clstm_forward(x_ids, params, LK):
    # Embedding lookup (gather) kept as JAX glue feeding the Pallas kernels.
    embed = params["embed_weight"][x_ids]                          # (N, L, D) f32
    # TODO(synk): nn.Dropout is stochastic; modeled as eval-mode identity here.
    N, L, D = embed.shape
    nK = len(LK)
    Kmax = max(LK)                                                 # all LK are odd
    max_pad = Kmax // 2

    # One shared zero-pad + im2col, hoisted out of the kernels (no unaligned
    # in-kernel slices); cast to bf16 for the MXU and to halve HBM read traffic.
    xpad = jnp.pad(embed, ((0, 0), (max_pad, max_pad), (0, 0)))
    cols = jnp.concatenate([xpad[:, m:m + L, :] for m in range(Kmax)], axis=-1)
    cols = cols.astype(jnp.bfloat16)                               # (N, L, Kmax*D)

    # Every branch's taps stacked into a shared (Kmax*D) contraction (zero-padded
    # taps for shorter kernels): one matmul per tile instead of K.
    Dout = params["convs"][0][0].shape[2]
    wc_list, bc_list = [], []
    for K, (w, b) in zip(LK, params["convs"]):
        off = max_pad - K // 2
        wz = jnp.zeros((Kmax, D, Dout), jnp.float32).at[off:off + K].set(w)
        wc_list.append(wz.reshape(Kmax * D, Dout))
        bc_list.append(b.reshape(1, Dout))
    wc = jnp.stack(wc_list).astype(jnp.bfloat16)                   # (nK, Kmax*D, Dout)
    bc = jnp.stack(bc_list)                                        # (nK, 1, Dout) f32

    # LSTM / head weights: gate columns (i,f,g,o) -> (i,f,o,g), bf16 on the MXU
    # path, biases kept f32 (added after f32 accumulation).
    lstm = [(_reorder_gates(wih).astype(jnp.bfloat16),
             _reorder_gates(whh).astype(jnp.bfloat16),
             _reorder_gates(bl).reshape(1, -1))
            for (wih, whh, bl) in params["lstm"]]
    w1 = params["w1"].astype(jnp.bfloat16)
    b1 = params["b1"].reshape(1, -1)
    w2 = params["w2"].astype(jnp.bfloat16)
    b2 = params["b2"].reshape(1, -1)

    H = params["lstm"][0][1].shape[0]
    G = 4 * H
    KD = Kmax * D
    B = L                       # LSTM "batch" (faithful to the torch code)
    tile_b = _pick_batch_tile(B)

    if len(lstm) == 1:
        # 1-layer LSTM: everything after the embedding in ONE fused pallas_call.
        wih0, whh0, bl0 = lstm[0]
        # Chunk of per-branch rows processed per grid step, capped so the bf16
        # cols tile + f32 xg scratch sit comfortably in (generation-sized) VMEM.
        vmem_cap = max(1, (_vmem_capacity_bytes() // 8)
                       // max(L * (4 * KD + 4 * G), 1))
        chunk, n_pad = _pick_chunk(N, cap=min(16, vmem_cap))
        if n_pad != N:
            cols = jnp.pad(cols, ((0, n_pad - N), (0, 0), (0, 0)))
        return clstm_fused(cols, wc, bc, wih0, bl0, whh0, w1, b1, w2, b2,
                           chunk=chunk, tile_b=tile_b, n_real=N, n_pad=n_pad, H=H)

    # Multi-layer LSTM: conv + layer-0 input projection (one kernel), chunked
    # full-sequence recurrences for non-final layers (with one grid-parallel
    # matmul for the next layer's input gates), then the fused head kernel.
    wih0, _, _ = lstm[0]
    tile_n = _pick_row_tile(N, L, KD, G)
    xg = conv_lstm_in(cols, wc, bc, wih0, lstm[0][2], tile_n=tile_n)  # (nK*N, L, 4H)

    T = nK * N                  # pseudo-time (torch cat along dim0)
    chunk, t_pad = _pick_chunk(T)
    if t_pad != T:
        xg = jnp.pad(xg, ((0, t_pad - T), (0, 0), (0, 0)))

    for li in range(len(lstm) - 1):
        h_seq = lstm_seq(xg, lstm[li][1], chunk=chunk, tile_b=tile_b)
        wih_n, _, bl_n = lstm[li + 1]
        xg = lstm_in_proj(h_seq, wih_n, bl_n, chunk=chunk)

    return lstm_head(xg, lstm[-1][1], w1, b1, w2, b2,
                     chunk=chunk, tile_b=tile_b, t_real=T, t_pad=t_pad)


# ---------------------------------------------------------------------------------
# Parameter init (same layout as torch, weights stored transposed for x @ W)
# ---------------------------------------------------------------------------------
def init_params(key, V, D, H, C, LK, num_layers, padding_id):
    ks = jax.random.split(key, 32)
    it = iter(ks)
    scale = 0.1

    def nrm(k, shape):
        return (scale * jax.random.normal(k, shape)).astype(jnp.float32)

    embed_weight = nrm(next(it), (V, D))
    embed_weight = embed_weight.at[padding_id].set(0.0)          # padding_idx row = 0

    convs = []
    for K in LK:
        w = nrm(next(it), (K, D, D))     # (taps, Din, Dout=D) == Conv2d(1, D, (K, D))
        b = nrm(next(it), (D,))
        convs.append((w, b))

    lstm = []
    for layer in range(num_layers):
        din = D if layer == 0 else H
        wih = nrm(next(it), (din, 4 * H))        # transposed vs torch W_ih (4H, din)
        whh = nrm(next(it), (H, 4 * H))          # transposed vs torch W_hh (4H, H)
        b = nrm(next(it), (4 * H,)) + nrm(next(it), (4 * H,))    # b_ih + b_hh
        lstm.append((wih, whh, b))

    w1 = nrm(next(it), (H, H // 2))
    b1 = nrm(next(it), (H // 2,))
    w2 = nrm(next(it), (H // 2, C))
    b2 = nrm(next(it), (C,))

    return {"embed_weight": embed_weight, "convs": convs, "lstm": lstm,
            "w1": w1, "b1": b1, "w2": w2, "b2": b2}


# ---------------------------------------------------------------------------------
# Pure-JAX reference (mirrors the torch forward, f32, torch gate order)
# ---------------------------------------------------------------------------------
def ref_forward(x_ids, params, LK):
    embed = params["embed_weight"][x_ids]
    N, L, D = embed.shape
    outs = []
    for K, (w, b) in zip(LK, params["convs"]):
        pad = K // 2
        xpad = jnp.pad(embed, ((0, 0), (pad, pad), (0, 0)))
        acc = jnp.zeros((N, L, w.shape[2]), jnp.float32)
        for k in range(K):
            acc = acc + jnp.einsum("nld,dc->nlc", xpad[:, k:k + L, :], w[k])
        outs.append(jnp.maximum(acc + b, 0.0))
    x = jnp.concatenate(outs, axis=0)                    # (T, L, D), pseudo-time major
    for (wih, whh, bl) in params["lstm"]:
        H = whh.shape[0]
        h = jnp.zeros((L, H), jnp.float32)
        c = jnp.zeros((L, H), jnp.float32)
        hs = []
        for t in range(x.shape[0]):
            gates = x[t] @ wih + h @ whh + bl
            i = jax.nn.sigmoid(gates[:, :H])
            f = jax.nn.sigmoid(gates[:, H:2 * H])
            g = jnp.tanh(gates[:, 2 * H:3 * H])
            o = jax.nn.sigmoid(gates[:, 3 * H:])
            c = f * c + i * g
            h = o * jnp.tanh(c)
            hs.append(h)
        x = jnp.stack(hs, axis=0)
    pooled = jnp.max(x, axis=0)                          # (L, H)  max_pool1d over time
    z = jnp.tanh(pooled) @ params["w1"] + params["b1"]
    return jnp.tanh(z) @ params["w2"] + params["b2"]


if __name__ == "__main__":
    # opts (synthetic): embed_num=32, embed_dim=16, class_num=4, kernel_sizes=[3,5],
    # lstm_hidden_dim=32, paddingId=0, dropout=0.0
    V, D, C = 32, 16, 4
    Ks = [3, 5]
    LK = [K + 1 if K % 2 == 0 else K for K in Ks]
    H = 32
    padding_id = 0
    N, L = 2, 8   # batch, seq_len

    key = jax.random.PRNGKey(0)
    k_ids, k_params = jax.random.split(key)
    x_ids = jax.random.randint(k_ids, (N, L), 0, V, dtype=jnp.int32)

    fwd = jax.jit(functools.partial(clstm_forward, LK=LK))

    # --- 1-layer config (torch default here): fully fused single-kernel path ---
    params1 = init_params(k_params, V, D, H, C, LK, num_layers=1,
                          padding_id=padding_id)
    logit1 = fwd(x_ids, params1)               # (L, C), faithful to the torch code
    jax.block_until_ready(logit1)
    assert logit1.shape == (L, C), logit1.shape
    with jax.default_matmul_precision("highest"):
        ref1 = ref_forward(x_ids, params1, LK)
    err1 = float(jnp.max(jnp.abs(logit1 - ref1)))
    # bf16 weights/activations on the MXU path (f32 accumulation) -> loose tolerance.
    assert err1 < 2e-2, f"1-layer max abs diff vs f32 reference: {err1}"

    # --- 2-layer config exercises the multi-layer kernel path -----------------
    params2 = init_params(k_params, V, D, H, C, LK, num_layers=2,
                          padding_id=padding_id)
    logit2 = fwd(x_ids, params2)
    jax.block_until_ready(logit2)
    assert logit2.shape == (L, C), logit2.shape
    with jax.default_matmul_precision("highest"):
        ref2 = ref_forward(x_ids, params2, LK)
    err2 = float(jnp.max(jnp.abs(logit2 - ref2)))
    assert err2 < 2e-2, f"2-layer max abs diff vs f32 reference: {err2}"

    print("KERNEL_OK")
</pallas_src>

<mosaic_0001>
module attributes {stable_mosaic.version = 11 : i64} {
  func.func @_fused_clstm_kernel(%arg0: i32, %arg1: i32, %arg2: i32, %arg3: memref<2x8x80xbf16, #tpu.memory_space<vmem>>, %arg4: memref<1x80x16xbf16, #tpu.memory_space<vmem>>, %arg5: memref<1x1x16xf32, #tpu.memory_space<vmem>>, %arg6: memref<16x128xbf16, #tpu.memory_space<vmem>>, %arg7: memref<1x128xf32, #tpu.memory_space<vmem>>, %arg8: memref<32x128xbf16, #tpu.memory_space<vmem>>, %arg9: memref<32x16xbf16, #tpu.memory_space<vmem>>, %arg10: memref<1x16xf32, #tpu.memory_space<vmem>>, %arg11: memref<16x4xbf16, #tpu.memory_space<vmem>>, %arg12: memref<1x4xf32, #tpu.memory_space<vmem>>, %arg13: memref<8x4xf32, #tpu.memory_space<vmem>>, %arg14: memref<8x32xf32, #tpu.memory_space<vmem>>, %arg15: memref<8x32xf32, #tpu.memory_space<vmem>>, %arg16: memref<8x32xf32, #tpu.memory_space<vmem>>, %arg17: memref<2x8x128xf32, #tpu.memory_space<vmem>>) attributes {dimension_semantics = [#tpu.dimension_semantics<parallel>, #tpu.dimension_semantics<arbitrary>, #tpu.dimension_semantics<arbitrary>], iteration_bounds = array<i64: 1, 2, 1>, scalar_prefetch = 0 : i64, scratch_operands = 4 : i64, tpu.core_type = #tpu.core_type<tc>, window_params = [{transform_indices = @transform_0, window_bounds = array<i64: 2, 8, 80>}, {transform_indices = @transform_1, window_bounds = array<i64: 1, 80, 16>}, {transform_indices = @transform_2, window_bounds = array<i64: 1, 1, 16>}, {pipeline_mode = #tpu.pipeline_mode<synchronous>, transform_indices = @transform_3, window_bounds = array<i64: 16, 128>}, {pipeline_mode = #tpu.pipeline_mode<synchronous>, transform_indices = @transform_4, window_bounds = array<i64: 1, 128>}, {pipeline_mode = #tpu.pipeline_mode<synchronous>, transform_indices = @transform_5, window_bounds = array<i64: 32, 128>}, {pipeline_mode = #tpu.pipeline_mode<synchronous>, transform_indices = @transform_6, window_bounds = array<i64: 32, 16>}, {pipeline_mode = #tpu.pipeline_mode<synchronous>, transform_indices = @transform_7, window_bounds = array<i64: 1, 16>}, {pipeline_mode = #tpu.pipeline_mode<synchronous>, transform_indices = @transform_8, window_bounds = array<i64: 16, 4>}, {pipeline_mode = #tpu.pipeline_mode<synchronous>, transform_indices = @transform_9, window_bounds = array<i64: 1, 4>}, {transform_indices = @transform_10, window_bounds = array<i64: 8, 4>}]} {
    %c0_i32 = arith.constant 0 : i32
    %0 = arith.cmpi eq, %arg1, %c0_i32 : i32
    %c0_i32_0 = arith.constant 0 : i32
    %1 = arith.cmpi eq, %arg2, %c0_i32_0 : i32
    %2 = arith.andi %0, %1 : i1
    %3 = arith.extui %2 : i1 to i32
    %c0_i32_1 = arith.constant 0 : i32
    %4 = arith.cmpi ne, %3, %c0_i32_1 : i32
    scf.if %4 {
      %cst_45 = arith.constant 0.000000e+00 : f32
      %82 = vector.broadcast %cst_45 : f32 to vector<8x32xf32>
      %c0_46 = arith.constant 0 : index
      %c0_47 = arith.constant 0 : index
      %83 = vector.load %arg14[%c0_46, %c0_47] : memref<8x32xf32, #tpu.memory_space<vmem>>, vector<8x32xf32>
      tpu.vector_store %arg14[%c0_46, %c0_47], %82 {strides = array<i32>} : memref<8x32xf32, #tpu.memory_space<vmem>>, vector<8x32xf32>,
      %cst_48 = arith.constant 0.000000e+00 : f32
      %84 = vector.broadcast %cst_48 : f32 to vector<8x32xf32>
      %c0_49 = arith.constant 0 : index
      %c0_50 = arith.constant 0 : index
      %85 = vector.load %arg15[%c0_49, %c0_50] : memref<8x32xf32, #tpu.memory_space<vmem>>, vector<8x32xf32>
      tpu.vector_store %arg15[%c0_49, %c0_50], %84 {strides = array<i32>} : memref<8x32xf32, #tpu.memory_space<vmem>>, vector<8x32xf32>,
      %cst_51 = arith.constant 0xFF800000 : f32
      %86 = vector.broadcast %cst_51 : f32 to vector<8x32xf32>
      %c0_52 = arith.constant 0 : index
      %c0_53 = arith.constant 0 : index
      %87 = vector.load %arg16[%c0_52, %c0_53] : memref<8x32xf32, #tpu.memory_space<vmem>>, vector<8x32xf32>
      tpu.vector_store %arg16[%c0_52, %c0_53], %86 {strides = array<i32>} : memref<8x32xf32, #tpu.memory_space<vmem>>, vector<8x32xf32>,
    } else {
    }
    %c0 = arith.constant 0 : index
    %c0_2 = arith.constant 0 : index
    %c0_3 = arith.constant 0 : index
    %5 = vector.load %arg3[%c0, %c0_2, %c0_3] : memref<2x8x80xbf16, #tpu.memory_space<vmem>>, vector<2x8x80xbf16>
    %6 = vector.shape_cast %5 : vector<2x8x80xbf16> to vector<16x80xbf16>
    %c0_4 = arith.constant 0 : index
    %c0_5 = arith.constant 0 : index
    %c0_6 = arith.constant 0 : index
    %7 = vector.load %arg4[%c0_4, %c0_5, %c0_6] : memref<1x80x16xbf16, #tpu.memory_space<vmem>>, vector<1x80x16xbf16>
    %8 = vector.shape_cast %7 : vector<1x80x16xbf16> to vector<80x16xbf16>
    %cst = arith.constant dense<0.000000e+00> : vector<16x16xf32>
    %9 = tpu.matmul %6, %8, %cst {dimension_numbers = #tpu.dot_dimension_numbers<[1], [0], [0], [1], [0, 0, 1, 1], [], []>} : vector<16x80xbf16>, vector<80x16xbf16>, vector<16x16xf32> -> vector<16x16xf32>
    %c0_7 = arith.constant 0 : index
    %c0_8 = arith.constant 0 : index
    %c0_9 = arith.constant 0 : index
    %10 = vector.load %arg5[%c0_7, %c0_8, %c0_9] : memref<1x1x16xf32, #tpu.memory_space<vmem>>, vector<1x1x16xf32>
    %11 = vector.shape_cast %10 : vector<1x1x16xf32> to vector<1x16xf32>
    %12 = vector.broadcast %11 : vector<1x16xf32> to vector<16x16xf32>
    %13 = arith.addf %9, %12 : vector<16x16xf32>
    %cst_10 = arith.constant 0.000000e+00 : f32
    %14 = vector.broadcast %cst_10 : f32 to vector<16x16xf32>
    %15 = arith.maximumf %13, %14 : vector<16x16xf32>
    %16 = arith.truncf %15 : vector<16x16xf32> to vector<16x16xbf16>
    %c0_11 = arith.constant 0 : index
    %c0_12 = arith.constant 0 : index
    %17 = vector.load %arg6[%c0_11, %c0_12] : memref<16x128xbf16, #tpu.memory_space<vmem>>, vector<16x128xbf16>
    %cst_13 = arith.constant dense<0.000000e+00> : vector<16x128xf32>
    %18 = tpu.matmul %16, %17, %cst_13 {dimension_numbers = #tpu.dot_dimension_numbers<[1], [0], [0], [1], [0, 0, 1, 1], [], []>} : vector<16x16xbf16>, vector<16x128xbf16>, vector<16x128xf32> -> vector<16x128xf32>
    %c0_14 = arith.constant 0 : index
    %c0_15 = arith.constant 0 : index
    %19 = vector.load %arg7[%c0_14, %c0_15] : memref<1x128xf32, #tpu.memory_space<vmem>>, vector<1x128xf32>
    %20 = vector.broadcast %19 : vector<1x128xf32> to vector<16x128xf32>
    %21 = arith.addf %18, %20 : vector<16x128xf32>
    %22 = vector.shape_cast %21 : vector<16x128xf32> to vector<2x8x128xf32>
    %c0_16 = arith.constant 0 : index
    %c0_17 = arith.constant 0 : index
    %c0_18 = arith.constant 0 : index
    %23 = vector.load %arg17[%c0_16, %c0_17, %c0_18] : memref<2x8x128xf32, #tpu.memory_space<vmem>>, vector<2x8x128xf32>
    tpu.vector_store %arg17[%c0_16, %c0_17, %c0_18], %22 {strides = array<i32>} : memref<2x8x128xf32, #tpu.memory_space<vmem>>, vector<2x8x128xf32>,
    %c0_19 = arith.constant 0 : index
    %c0_20 = arith.constant 0 : index
    %24 = vector.load %arg8[%c0_19, %c0_20] : memref<32x128xbf16, #tpu.memory_space<vmem>>, vector<32x128xbf16>
    %c0_21 = arith.constant 0 : index
    %c0_22 = arith.constant 0 : index
    %25 = vector.load %arg14[%c0_21, %c0_22] : memref<8x32xf32, #tpu.memory_space<vmem>>, vector<8x32xf32>
    %c0_23 = arith.constant 0 : index
    %c0_24 = arith.constant 0 : index
    %26 = vector.load %arg15[%c0_23, %c0_24] : memref<8x32xf32, #tpu.memory_space<vmem>>, vector<8x32xf32>
    %c0_25 = arith.constant 0 : index
    %c0_26 = arith.constant 0 : index
    %27 = vector.load %arg16[%c0_25, %c0_26] : memref<8x32xf32, #tpu.memory_space<vmem>>, vector<8x32xf32>
    %c0_i32_27 = arith.constant 0 : i32
    %28 = arith.index_cast %c0_i32_27 : i32 to index
    %c0_28 = arith.constant 0 : index
    %c0_29 = arith.constant 0 : index
    %29 = vector.load %arg17[%28, %c0_28, %c0_29] : memref<2x8x128xf32, #tpu.memory_space<vmem>>, vector<1x8x128xf32>
    %30 = vector.shape_cast %29 : vector<1x8x128xf32> to vector<8x128xf32>
    %31 = arith.truncf %25 : vector<8x32xf32> to vector<8x32xbf16>
    %cst_30 = arith.constant dense<0.000000e+00> : vector<8x128xf32>
    %32 = tpu.matmul %31, %24, %cst_30 {dimension_numbers = #tpu.dot_dimension_numbers<[1], [0], [0], [1], [0, 0, 1, 1], [], []>} : vector<8x32xbf16>, vector<32x128xbf16>, vector<8x128xf32> -> vector<8x128xf32>
    %33 = arith.addf %30, %32 : vector<8x128xf32>
    %34 = vector.extract_strided_slice %33 {offsets = [0, 0], sizes = [8, 96], strides = [1, 1]} : vector<8x128xf32> to vector<8x96xf32>
    %35 = arith.negf %34 : vector<8x96xf32>
    %36 = math.exp %35 : vector<8x96xf32>
    %cst_31 = arith.constant 1.000000e+00 : f32
    %37 = vector.broadcast %cst_31 : f32 to vector<8x96xf32>
    %38 = arith.addf %37, %36 : vector<8x96xf32>
    %39 = arith.divf %37, %38 : vector<8x96xf32>
    %40 = vector.extract_strided_slice %33 {offsets = [0, 96], sizes = [8, 32], strides = [1, 1]} : vector<8x128xf32> to vector<8x32xf32>
    %41 = math.tanh %40 : vector<8x32xf32>
    %42 = vector.extract_strided_slice %39 {offsets = [0, 0], sizes = [8, 32], strides = [1, 1]} : vector<8x96xf32> to vector<8x32xf32>
    %43 = vector.extract_strided_slice %39 {offsets = [0, 32], sizes = [8, 32], strides = [1, 1]} : vector<8x96xf32> to vector<8x32xf32>
    %44 = vector.extract_strided_slice %39 {offsets = [0, 64], sizes = [8, 32], strides = [1, 1]} : vector<8x96xf32> to vector<8x32xf32>
    %45 = arith.mulf %43, %26 : vector<8x32xf32>
    %46 = arith.mulf %42, %41 : vector<8x32xf32>
    %47 = arith.addf %45, %46 : vector<8x32xf32>
    %48 = math.tanh %47 : vector<8x32xf32>
    %49 = arith.mulf %44, %48 : vector<8x32xf32>
    %50 = arith.maximumf %27, %49 : vector<8x32xf32>
    %c1_i32 = arith.constant 1 : i32
    %51 = arith.index_cast %c1_i32 : i32 to index
    %c0_32 = arith.constant 0 : index
    %c0_33 = arith.constant 0 : index
    %52 = vector.load %arg17[%51, %c0_32, %c0_33] : memref<2x8x128xf32, #tpu.memory_space<vmem>>, vector<1x8x128xf32>
    %53 = vector.shape_cast %52 : vector<1x8x128xf32> to vector<8x128xf32>
    %54 = arith.truncf %49 : vector<8x32xf32> to vector<8x32xbf16>
    %cst_34 = arith.constant dense<0.000000e+00> : vector<8x128xf32>
    %55 = tpu.matmul %54, %24, %cst_34 {dimension_numbers = #tpu.dot_dimension_numbers<[1], [0], [0], [1], [0, 0, 1, 1], [], []>} : vector<8x32xbf16>, vector<32x128xbf16>, vector<8x128xf32> -> vector<8x128xf32>
    %56 = arith.addf %53, %55 : vector<8x128xf32>
    %57 = vector.extract_strided_slice %56 {offsets = [0, 0], sizes = [8, 96], strides = [1, 1]} : vector<8x128xf32> to vector<8x96xf32>
    %58 = arith.negf %57 : vector<8x96xf32>
    %59 = math.exp %58 : vector<8x96xf32>
    %cst_35 = arith.constant 1.000000e+00 : f32
    %60 = vector.broadcast %cst_35 : f32 to vector<8x96xf32>
    %61 = arith.addf %60, %59 : vector<8x96xf32>
    %62 = arith.divf %60, %61 : vector<8x96xf32>
    %63 = vector.extract_strided_slice %56 {offsets = [0, 96], sizes = [8, 32], strides = [1, 1]} : vector<8x128xf32> to vector<8x32xf32>
    %64 = math.tanh %63 : vector<8x32xf32>
    %65 = vector.extract_strided_slice %62 {offsets = [0, 0], sizes = [8, 32], strides = [1, 1]} : vector<8x96xf32> to vector<8x32xf32>
    %66 = vector.extract_strided_slice %62 {offsets = [0, 32], sizes = [8, 32], strides = [1, 1]} : vector<8x96xf32> to vector<8x32xf32>
    %67 = vector.extract_strided_slice %62 {offsets = [0, 64], sizes = [8, 32], strides = [1, 1]} : vector<8x96xf32> to vector<8x32xf32>
    %68 = arith.mulf %66, %47 : vector<8x32xf32>
    %69 = arith.mulf %65, %64 : vector<8x32xf32>
    %70 = arith.addf %68, %69 : vector<8x32xf32>
    %71 = math.tanh %70 : vector<8x32xf32>
    %72 = arith.mulf %67, %71 : vector<8x32xf32>
    %73 = arith.maximumf %50, %72 : vector<8x32xf32>
    %c2_i32 = arith.constant 2 : i32
    %c0_36 = arith.constant 0 : index
    %c0_37 = arith.constant 0 : index
    %74 = vector.load %arg14[%c0_36, %c0_37] : memref<8x32xf32, #tpu.memory_space<vmem>>, vector<8x32xf32>
    tpu.vector_store %arg14[%c0_36, %c0_37], %72 {strides = array<i32>} : memref<8x32xf32, #tpu.memory_space<vmem>>, vector<8x32xf32>,
    %c0_38 = arith.constant 0 : index
    %c0_39 = arith.constant 0 : index
    %75 = vector.load %arg15[%c0_38, %c0_39] : memref<8x32xf32, #tpu.memory_space<vmem>>, vector<8x32xf32>
    tpu.vector_store %arg15[%c0_38, %c0_39], %70 {strides = array<i32>} : memref<8x32xf32, #tpu.memory_space<vmem>>, vector<8x32xf32>,
    %c0_40 = arith.constant 0 : index
    %c0_41 = arith.constant 0 : index
    %76 = vector.load %arg16[%c0_40, %c0_41] : memref<8x32xf32, #tpu.memory_space<vmem>>, vector<8x32xf32>
    tpu.vector_store %arg16[%c0_40, %c0_41], %73 {strides = array<i32>} : memref<8x32xf32, #tpu.memory_space<vmem>>, vector<8x32xf32>,
    %c1_i32_42 = arith.constant 1 : i32
    %77 = arith.cmpi eq, %arg1, %c1_i32_42 : i32
    %c0_i32_43 = arith.constant 0 : i32
    %78 = arith.cmpi eq, %arg2, %c0_i32_43 : i32
    %79 = arith.andi %77, %78 : i1
    %80 = arith.extui %79 : i1 to i32
    %c0_i32_44 = arith.constant 0 : i32
    %81 = arith.cmpi ne, %80, %c0_i32_44 : i32
    scf.if %81 {
      %82 = math.tanh %73 : vector<8x32xf32>
      %83 = arith.truncf %82 : vector<8x32xf32> to vector<8x32xbf16>
      %c0_45 = arith.constant 0 : index
      %c0_46 = arith.constant 0 : index
      %84 = vector.load %arg9[%c0_45, %c0_46] : memref<32x16xbf16, #tpu.memory_space<vmem>>, vector<32x16xbf16>
      %cst_47 = arith.constant dense<0.000000e+00> : vector<8x16xf32>
      %85 = tpu.matmul %83, %84, %cst_47 {dimension_numbers = #tpu.dot_dimension_numbers<[1], [0], [0], [1], [0, 0, 1, 1], [], []>} : vector<8x32xbf16>, vector<32x16xbf16>, vector<8x16xf32> -> vector<8x16xf32>
      %c0_48 = arith.constant 0 : index
      %c0_49 = arith.constant 0 : index
      %86 = vector.load %arg10[%c0_48, %c0_49] : memref<1x16xf32, #tpu.memory_space<vmem>>, vector<1x16xf32>
      %87 = vector.broadcast %86 : vector<1x16xf32> to vector<8x16xf32>
      %88 = arith.addf %85, %87 : vector<8x16xf32>
      %89 = math.tanh %88 : vector<8x16xf32>
      %90 = arith.truncf %89 : vector<8x16xf32> to vector<8x16xbf16>
      %c0_50 = arith.constant 0 : index
      %c0_51 = arith.constant 0 : index
      %91 = vector.load %arg11[%c0_50, %c0_51] : memref<16x4xbf16, #tpu.memory_space<vmem>>, vector<16x4xbf16>
      %cst_52 = arith.constant dense<0.000000e+00> : vector<8x4xf32>
      %92 = tpu.matmul %90, %91, %cst_52 {dimension_numbers = #tpu.dot_dimension_numbers<[1], [0], [0], [1], [0, 0, 1, 1], [], []>} : vector<8x16xbf16>, vector<16x4xbf16>, vector<8x4xf32> -> vector<8x4xf32>
      %c0_53 = arith.constant 0 : index
      %c0_54 = arith.constant 0 : index
      %93 = vector.load %arg12[%c0_53, %c0_54] : memref<1x4xf32, #tpu.memory_space<vmem>>, vector<1x4xf32>
      %94 = vector.broadcast %93 : vector<1x4xf32> to vector<8x4xf32>
      %95 = arith.addf %92, %94 : vector<8x4xf32>
      %c0_55 = arith.constant 0 : index
      %c0_56 = arith.constant 0 : index
      %96 = vector.load %arg13[%c0_55, %c0_56] : memref<8x4xf32, #tpu.memory_space<vmem>>, vector<8x4xf32>
      tpu.vector_store %arg13[%c0_55, %c0_56], %95 {strides = array<i32>} : memref<8x4xf32, #tpu.memory_space<vmem>>, vector<8x4xf32>,
    } else {
    }
    return
  }
  func.func @transform_0(%arg0: i32, %arg1: i32, %arg2: i32) -> (i32, i32, i32) {
    %c0_i32 = arith.constant 0 : i32
    %c0_i32_0 = arith.constant 0 : i32
    return %arg2, %arg0, %c0_i32 : i32, i32, i32
  }
  func.func @transform_1(%arg0: i32, %arg1: i32, %arg2: i32) -> (i32, i32, i32) {
    %c0_i32 = arith.constant 0 : i32
    %c0_i32_0 = arith.constant 0 : i32
    %c0_i32_1 = arith.constant 0 : i32
    return %arg1, %c0_i32, %c0_i32_0 : i32, i32, i32
  }
  func.func @transform_2(%arg0: i32, %arg1: i32, %arg2: i32) -> (i32, i32, i32) {
    %c0_i32 = arith.constant 0 : i32
    %c0_i32_0 = arith.constant 0 : i32
    %c0_i32_1 = arith.constant 0 : i32
    return %arg1, %c0_i32, %c0_i32_0 : i32, i32, i32
  }
  func.func @transform_3(%arg0: i32, %arg1: i32, %arg2: i32) -> (i32, i32) {
    %c0_i32 = arith.constant 0 : i32
    %c0_i32_0 = arith.constant 0 : i32
    %c0_i32_1 = arith.constant 0 : i32
    return %c0_i32, %c0_i32_0 : i32, i32
  }
  func.func @transform_4(%arg0: i32, %arg1: i32, %arg2: i32) -> (i32, i32) {
    %c0_i32 = arith.constant 0 : i32
    %c0_i32_0 = arith.constant 0 : i32
    %c0_i32_1 = arith.constant 0 : i32
    return %c0_i32, %c0_i32_0 : i32, i32
  }
  func.func @transform_5(%arg0: i32, %arg1: i32, %arg2: i32) -> (i32, i32) {
    %c0_i32 = arith.constant 0 : i32
    %c0_i32_0 = arith.constant 0 : i32
    %c0_i32_1 = arith.constant 0 : i32
    return %c0_i32, %c0_i32_0 : i32, i32
  }
  func.func @transform_6(%arg0: i32, %arg1: i32, %arg2: i32) -> (i32, i32) {
    %c0_i32 = arith.constant 0 : i32
    %c0_i32_0 = arith.constant 0 : i32
    %c0_i32_1 = arith.constant 0 : i32
    return %c0_i32, %c0_i32_0 : i32, i32
  }
  func.func @transform_7(%arg0: i32, %arg1: i32, %arg2: i32) -> (i32, i32) {
    %c0_i32 = arith.constant 0 : i32
    %c0_i32_0 = arith.constant 0 : i32
    %c0_i32_1 = arith.constant 0 : i32
    return %c0_i32, %c0_i32_0 : i32, i32
  }
  func.func @transform_8(%arg0: i32, %arg1: i32, %arg2: i32) -> (i32, i32) {
    %c0_i32 = arith.constant 0 : i32
    %c0_i32_0 = arith.constant 0 : i32
    %c0_i32_1 = arith.constant 0 : i32
    return %c0_i32, %c0_i32_0 : i32, i32
  }
  func.func @transform_9(%arg0: i32, %arg1: i32, %arg2: i32) -> (i32, i32) {
    %c0_i32 = arith.constant 0 : i32
    %c0_i32_0 = arith.constant 0 : i32
    %c0_i32_1 = arith.constant 0 : i32
    return %c0_i32, %c0_i32_0 : i32, i32
  }
  func.func @transform_10(%arg0: i32, %arg1: i32, %arg2: i32) -> (i32, i32) {
    %c0_i32 = arith.constant 0 : i32
    %c0_i32_0 = arith.constant 0 : i32
    return %arg0, %c0_i32 : i32, i32
  }
}

</mosaic_0001>

<llo_original>
// kernel: clstm_forward.1
$region0: #{clstm_forward.1}
  #allocation0 [shape = 'u32[]', space=smem, size = 0x4, offset = 0x4, fixed_abs, tag = 'smem constant byte address 0x4 - core index']
  #allocation1 [shape = 'u32[144,128]{1,0:T(1,128)}', space=vmem, size = 0x12000, scoped, tag = 'internal scratch']
  #allocation2 [shape = 'f32[8,32]{1,0:T(8,128)}', space=vmem, size = 0x1000, scoped, tag = 'scratch operand']
  #allocation3 [shape = 'f32[8,32]{1,0:T(8,128)}', space=vmem, size = 0x1000, scoped, tag = 'scratch operand']
  #allocation4 [shape = 'f32[8,32]{1,0:T(8,128)}', space=vmem, size = 0x1000, scoped, tag = 'scratch operand']
  #allocation5 [shape = 'f32[2,8,128]{2,1,0:T(8,128)}', space=vmem, size = 0x2000, scoped, tag = 'scratch operand']
  %s0 = inlined_call_operand.vmem [shape: bf16[2,8,80], index: 0, kind: input, shape index: {}]
  %s1 = inlined_call_operand.vmem [shape: bf16[2,80,16], index: 1, kind: input, shape index: {}]
  %s2 = inlined_call_operand.vmem [shape: f32[2,1,16], index: 2, kind: input, shape index: {}]
  %s3 = inlined_call_operand.vmem [shape: bf16[16,128], index: 3, kind: input, shape index: {}]
  %s4 = inlined_call_operand.vmem [shape: f32[1,128], index: 4, kind: input, shape index: {}]
  %s5 = inlined_call_operand.vmem [shape: bf16[32,128], index: 5, kind: input, shape index: {}]
  %s6 = inlined_call_operand.vmem [shape: bf16[32,16], index: 6, kind: input, shape index: {}]
  %s7 = inlined_call_operand.vmem [shape: f32[1,16], index: 7, kind: input, shape index: {}]
  %s8 = inlined_call_operand.vmem [shape: bf16[16,4], index: 8, kind: input, shape index: {}]
  %s9 = inlined_call_operand.vmem [shape: f32[1,4], index: 9, kind: input, shape index: {}]
  %s10 = inlined_call_operand.vmem [shape: f32[8,4], index: 10, kind: output, shape index: {}]
  %s11 = sld [smem:[#allocation0]]
  $region81: #{clstm_forward.1} parent=0
    _
  %s13 = ssub.s32 1, %s11
  %s14 = scalar_select 0, %s13, %s11
  loop: start=0, step=1, limit=4
  $region2: #{clstm_forward.1} parent=0 // loop_pre_header
    _
  $region3: #{clstm_forward.1} parent=0 // loop_header
    %s16 = sphi 0, %s20
    %p17 = scmp.ge.s32.totalorder %s16, 4
    %s23 = sphi 0, %s42
    %s24 = sphi 0, %s38
    %s25 = sphi 0, %s34
    %s26 = sphi 0, %s23
    %s27 = sphi 0, %s24
    %s28 = sphi 0, %s25
    %s29 = sphi 0, %s26
    %s30 = sphi 0, %s27
    %s31 = sphi 0, %s28
    %s47 = sphi 0, %s49
    %s50 = sphi 0, %s47
    %s51 = sphi 0, %s50
    %s67 = sphi 0, %s51
    %s73 = sphi 0, %s75
    %s76 = sphi 0, %s73
    %s77 = sphi 0, %s76
    %s93 = sphi 0, %s77
    %s99 = sphi 0, %s101
    %s102 = sphi 0, %s99
    %s103 = sphi 0, %s102
    %s119 = sphi 0, %s103
    %s123 = sphi 0, %s123
    %s125 = sphi 0, %s123
    %s126 = sphi 0, %s125
    %s140 = sphi 0, %s126
    %s144 = sphi 0, %s144
    %s146 = sphi 0, %s144
    %s147 = sphi 0, %s146
    %s161 = sphi 0, %s147
    %s165 = sphi 0, %s165
    %s167 = sphi 0, %s165
    %s168 = sphi 0, %s167
    %s182 = sphi 0, %s168
    %s186 = sphi 0, %s186
    %s188 = sphi 0, %s186
    %s189 = sphi 0, %s188
    %s203 = sphi 0, %s189
    %s207 = sphi 0, %s207
    %s209 = sphi 0, %s207
    %s210 = sphi 0, %s209
    %s224 = sphi 0, %s210
    %s228 = sphi 0, %s228
    %s230 = sphi 0, %s228
    %s231 = sphi 0, %s230
    %s245 = sphi 0, %s231
    %s249 = sphi 0, %s249
    %s251 = sphi 0, %s249
    %s252 = sphi 0, %s251
    %s266 = sphi 0, %s252
    %s272 = sphi 0, %s274
    %s275 = sphi 0, %s272
    %s276 = sphi 0, %s275
    %s292 = sphi 0, %s276
  $region4: #{clstm_forward.1} parent=0 // loop_header_branch
    %19 = sbr.rel (%p17) target = $region8
  $region5: #{clstm_forward.1} parent=0 // loop_body
    %s21 = ssub.s32 %s16, 1
    %s22 = ssub.s32 %s16, 2
    %s32 = sadd.s32 1, %s25
    %p33 = scmp.ge.s32.totalorder %s32, 1
    %s34 = scalar_select %p33, 0, %s32
    %s35 = sadd.s32 1, %s24
    %s36 = scalar_select %p33, %s35, %s24
    %p37 = scmp.ge.s32.totalorder %s36, 2
    %s38 = scalar_select %p37, 0, %s36
    %s39 = sadd.s32 1, %s23
    %s40 = scalar_select %p37, %s39, %s23
    %p41 = scmp.ge.s32.totalorder %s40, 1
    %s42 = scalar_select %p41, 0, %s40
    %s43 = ssub.s32 %s25, %s34
    %s44 = ssub.s32 %s23, %s42
    %s45 = sor.u32 %s43, %s44
    %p46 = scmp.eq.s32.totalorder %s45, 0
    %s48 = sadd.s32 %s47, 1
    %s49 = scalar_select %p46, %s47, %s48
    %p52 = pneg %p46
    %p53 = scmp.eq.s32.totalorder %s16, 1
    %p54 = por %p52, %p53
    %p55 = scmp.ne.s32.totalorder %s47, %s50
    %p56 = scmp.eq.s32.totalorder %s16, 0
    %p57 = por %p55, %p56
    %p58 = scmp.ne.s32.totalorder %s47, %s50
    %p59 = scmp.eq.s32.totalorder %s21, 1
    %p60 = por %p58, %p59
    %p61 = scmp.ne.s32.totalorder %s50, %s51
    %p62 = scmp.eq.s32.totalorder %s21, 0
    %p63 = por %p61, %p62
    %p64 = scmp.ne.s32.totalorder %s50, %s51
    %p65 = scmp.eq.s32.totalorder %s22, 1
    %p66 = por %p64, %p65
    %p68 = scmp.ne.s32.totalorder %s51, %s67
    %p69 = scmp.eq.s32.totalorder %s22, 0
    %p70 = por %p68, %p69
    %s71 = ssub.s32 %s24, %s38
    %p72 = scmp.eq.s32.totalorder %s71, 0
    %s74 = sadd.s32 %s73, 1
    %s75 = scalar_select %p72, %s73, %s74
    %p78 = pneg %p72
    %p79 = scmp.eq.s32.totalorder %s16, 1
    %p80 = por %p78, %p79
    %p81 = scmp.ne.s32.totalorder %s73, %s76
    %p82 = scmp.eq.s32.totalorder %s16, 0
    %p83 = por %p81, %p82
    %p84 = scmp.ne.s32.totalorder %s73, %s76
    %p85 = scmp.eq.s32.totalorder %s21, 1
    %p86 = por %p84, %p85
    %p87 = scmp.ne.s32.totalorder %s76, %s77
    %p88 = scmp.eq.s32.totalorder %s21, 0
    %p89 = por %p87, %p88
    %p90 = scmp.ne.s32.totalorder %s76, %s77
    %p91 = scmp.eq.s32.totalorder %s22, 1
    %p92 = por %p90, %p91
    %p94 = scmp.ne.s32.totalorder %s77, %s93
    %p95 = scmp.eq.s32.totalorder %s22, 0
    %p96 = por %p94, %p95
    %s97 = ssub.s32 %s24, %s38
    %p98 = scmp.eq.s32.totalorder %s97, 0
    %s100 = sadd.s32 %s99, 1
    %s101 = scalar_select %p98, %s99, %s100
    %p104 = pneg %p98
    %p105 = scmp.eq.s32.totalorder %s16, 1
    %p106 = por %p104, %p105
    %p107 = scmp.ne.s32.totalorder %s99, %s102
    %p108 = scmp.eq.s32.totalorder %s16, 0
    %p109 = por %p107, %p108
    %p110 = scmp.ne.s32.totalorder %s99, %s102
    %p111 = scmp.eq.s32.totalorder %s21, 1
    %p112 = por %p110, %p111
    %p113 = scmp.ne.s32.totalorder %s102, %s103
    %p114 = scmp.eq.s32.totalorder %s21, 0
    %p115 = por %p113, %p114
    %p116 = scmp.ne.s32.totalorder %s102, %s103
    %p117 = scmp.eq.s32.totalorder %s22, 1
    %p118 = por %p116, %p117
    %p120 = scmp.ne.s32.totalorder %s103, %s119
    %p121 = scmp.eq.s32.totalorder %s22, 0
    %p122 = por %p120, %p121
    %s124 = sadd.s32 %s123, 1
    %p127 = scmp.eq.s32.totalorder %s16, 1
    %p128 = scmp.ne.s32.totalorder %s123, %s125
    %p129 = scmp.eq.s32.totalorder %s16, 0
    %p130 = por %p128, %p129
    %p131 = scmp.ne.s32.totalorder %s123, %s125
    %p132 = scmp.eq.s32.totalorder %s21, 1
    %p133 = por %p131, %p132
    %p134 = scmp.ne.s32.totalorder %s125, %s126
    %p135 = scmp.eq.s32.totalorder %s21, 0
    %p136 = por %p134, %p135
    %p137 = scmp.ne.s32.totalorder %s125, %s126
    %p138 = scmp.eq.s32.totalorder %s22, 1
    %p139 = por %p137, %p138
    %p141 = scmp.ne.s32.totalorder %s126, %s140
    %p142 = scmp.eq.s32.totalorder %s22, 0
    %p143 = por %p141, %p142
    %s145 = sadd.s32 %s144, 1
    %p148 = scmp.eq.s32.totalorder %s16, 1
    %p149 = scmp.ne.s32.totalorder %s144, %s146
    %p150 = scmp.eq.s32.totalorder %s16, 0
    %p151 = por %p149, %p150
    %p152 = scmp.ne.s32.totalorder %s144, %s146
    %p153 = scmp.eq.s32.totalorder %s21, 1
    %p154 = por %p152, %p153
    %p155 = scmp.ne.s32.totalorder %s146, %s147
    %p156 = scmp.eq.s32.totalorder %s21, 0
    %p157 = por %p155, %p156
    %p158 = scmp.ne.s32.totalorder %s146, %s147
    %p159 = scmp.eq.s32.totalorder %s22, 1
    %p160 = por %p158, %p159
    %p162 = scmp.ne.s32.totalorder %s147, %s161
    %p163 = scmp.eq.s32.totalorder %s22, 0
    %p164 = por %p162, %p163
    %s166 = sadd.s32 %s165, 1
    %p169 = scmp.eq.s32.totalorder %s16, 1
    %p170 = scmp.ne.s32.totalorder %s165, %s167
    %p171 = scmp.eq.s32.totalorder %s16, 0
    %p172 = por %p170, %p171
    %p173 = scmp.ne.s32.totalorder %s165, %s167
    %p174 = scmp.eq.s32.totalorder %s21, 1
    %p175 = por %p173, %p174
    %p176 = scmp.ne.s32.totalorder %s167, %s168
    %p177 = scmp.eq.s32.totalorder %s21, 0
    %p178 = por %p176, %p177
    %p179 = scmp.ne.s32.totalorder %s167, %s168
    %p180 = scmp.eq.s32.totalorder %s22, 1
    %p181 = por %p179, %p180
    %p183 = scmp.ne.s32.totalorder %s168, %s182
    %p184 = scmp.eq.s32.totalorder %s22, 0
    %p185 = por %p183, %p184
    %s187 = sadd.s32 %s186, 1
    %p190 = scmp.eq.s32.totalorder %s16, 1
    %p191 = scmp.ne.s32.totalorder %s186, %s188
    %p192 = scmp.eq.s32.totalorder %s16, 0
    %p193 = por %p191, %p192
    %p194 = scmp.ne.s32.totalorder %s186, %s188
    %p195 = scmp.eq.s32.totalorder %s21, 1
    %p196 = por %p194, %p195
    %p197 = scmp.ne.s32.totalorder %s188, %s189
    %p198 = scmp.eq.s32.totalorder %s21, 0
    %p199 = por %p197, %p198
    %p200 = scmp.ne.s32.totalorder %s188, %s189
    %p201 = scmp.eq.s32.totalorder %s22, 1
    %p202 = por %p200, %p201
    %p204 = scmp.ne.s32.totalorder %s189, %s203
    %p205 = scmp.eq.s32.totalorder %s22, 0
    %p206 = por %p204, %p205
    %s208 = sadd.s32 %s207, 1
    %p211 = scmp.eq.s32.totalorder %s16, 1
    %p212 = scmp.ne.s32.totalorder %s207, %s209
    %p213 = scmp.eq.s32.totalorder %s16, 0
    %p214 = por %p212, %p213
    %p215 = scmp.ne.s32.totalorder %s207, %s209
    %p216 = scmp.eq.s32.totalorder %s21, 1
    %p217 = por %p215, %p216
    %p218 = scmp.ne.s32.totalorder %s209, %s210
    %p219 = scmp.eq.s32.totalorder %s21, 0
    %p220 = por %p218, %p219
    %p221 = scmp.ne.s32.totalorder %s209, %s210
    %p222 = scmp.eq.s32.totalorder %s22, 1
    %p223 = por %p221, %p222
    %p225 = scmp.ne.s32.totalorder %s210, %s224
    %p226 = scmp.eq.s32.totalorder %s22, 0
    %p227 = por %p225, %p226
    %s229 = sadd.s32 %s228, 1
    %p232 = scmp.eq.s32.totalorder %s16, 1
    %p233 = scmp.ne.s32.totalorder %s228, %s230
    %p234 = scmp.eq.s32.totalorder %s16, 0
    %p235 = por %p233, %p234
    %p236 = scmp.ne.s32.totalorder %s228, %s230
    %p237 = scmp.eq.s32.totalorder %s21, 1
    %p238 = por %p236, %p237
    %p239 = scmp.ne.s32.totalorder %s230, %s231
    %p240 = scmp.eq.s32.totalorder %s21, 0
    %p241 = por %p239, %p240
    %p242 = scmp.ne.s32.totalorder %s230, %s231
    %p243 = scmp.eq.s32.totalorder %s22, 1
    %p244 = por %p242, %p243
    %p246 = scmp.ne.s32.totalorder %s231, %s245
    %p247 = scmp.eq.s32.totalorder %s22, 0
    %p248 = por %p246, %p247
    %s250 = sadd.s32 %s249, 1
    %p253 = scmp.eq.s32.totalorder %s16, 1
    %p254 = scmp.ne.s32.totalorder %s249, %s251
    %p255 = scmp.eq.s32.totalorder %s16, 0
    %p256 = por %p254, %p255
    %p257 = scmp.ne.s32.totalorder %s249, %s251
    %p258 = scmp.eq.s32.totalorder %s21, 1
    %p259 = por %p257, %p258
    %p260 = scmp.ne.s32.totalorder %s251, %s252
    %p261 = scmp.eq.s32.totalorder %s21, 0
    %p262 = por %p260, %p261
    %p263 = scmp.ne.s32.totalorder %s251, %s252
    %p264 = scmp.eq.s32.totalorder %s22, 1
    %p265 = por %p263, %p264
    %p267 = scmp.ne.s32.totalorder %s252, %s266
    %p268 = scmp.eq.s32.totalorder %s22, 0
    %p269 = por %p267, %p268
    %s270 = ssub.s32 %s23, %s42
    %p271 = scmp.eq.s32.totalorder %s270, 0
    %s273 = sadd.s32 %s272, 1
    %s274 = scalar_select %p271, %s272, %s273
    %p277 = pneg %p271
    %p278 = scmp.eq.s32.totalorder %s16, 1
    %p279 = por %p277, %p278
    %p280 = scmp.ne.s32.totalorder %s272, %s275
    %p281 = scmp.eq.s32.totalorder %s16, 0
    %p282 = por %p280, %p281
    %p283 = scmp.ne.s32.totalorder %s272, %s275
    %p284 = scmp.eq.s32.totalorder %s21, 1
    %p285 = por %p283, %p284
    %p286 = scmp.ne.s32.totalorder %s275, %s276
    %p287 = scmp.eq.s32.totalorder %s21, 0
    %p288 = por %p286, %p287
    %p289 = scmp.ne.s32.totalorder %s275, %s276
    %p290 = scmp.eq.s32.totalorder %s22, 1
    %p291 = por %p289, %p290
    %p293 = scmp.ne.s32.totalorder %s276, %s292
    %p294 = scmp.eq.s32.totalorder %s22, 0
    %p295 = por %p293, %p294
    %p296 = scmp.le.s32.totalorder 1, %s16
    %p297 = scmp.lt.s32.totalorder %s16, 3
    %p298 = pnand %p296, %p297
    %p299 = pneg %p298
    // Predicated region
    $region9: #{clstm_forward.1} parent=5 // pred_check
      _
    $region10: #{clstm_forward.1} parent=5 // pred_check_branch
      %301 = sbr.rel (%p298) target = $region12
    $region11: #{clstm_forward.1} parent=5 // pred_region
      %s302 = ssub.s32 %s16, 1
      // Predicated region
      $region13: #{clstm_forward.1} parent=11 // pred_check
        %p303 = pneg %p63
      $region14: #{clstm_forward.1} parent=11 // pred_check_branch
        %305 = sbr.rel (%p303) target = $region16
      $region15: #{clstm_forward.1} parent=11 // pred_region
        %s306 = smul.u32 2, %s28
        %p307 = scmp.lt.s32.totalorder %s306, 1
        %s308 = scalar_select %p307, %s306, 1
        %p309 = scmp.lt.s32.totalorder %s26, 0
        %s310 = scalar_select %p309, %s26, 0
        %s311 = sadd.s32 %s310, %s308
        %s312 = smul.addr %s311, 4
        %s313 = scalar_lea.vmem %s0, %s312
        %s314 = smul.u32 2, %s28
      $region16: #{clstm_forward.1} parent=11 // pred_fallthru
        _
      // Predicated region
      $region17: #{clstm_forward.1} parent=11 // pred_check
        %p315 = pneg %p136
      $region18: #{clstm_forward.1} parent=11 // pred_check_branch
        %317 = sbr.rel (%p315) target = $region20
      $region19: #{clstm_forward.1} parent=11 // pred_region
        _
      $region20: #{clstm_forward.1} parent=11 // pred_fallthru
        _
      // Predicated region
      $region21: #{clstm_forward.1} parent=11 // pred_check
        %p318 = pneg %p157
      $region22: #{clstm_forward.1} parent=11 // pred_check_branch
        %320 = sbr.rel (%p318) target = $region24
      $region23: #{clstm_forward.1} parent=11 // pred_region
        _
      $region24: #{clstm_forward.1} parent=11 // pred_fallthru
        _
      // Predicated region
      $region25: #{clstm_forward.1} parent=11 // pred_check
        %p321 = pneg %p178
      $region26: #{clstm_forward.1} parent=11 // pred_check_branch
        %323 = sbr.rel (%p321) target = $region28
      $region27: #{clstm_forward.1} parent=11 // pred_region
        _
      $region28: #{clstm_forward.1} parent=11 // pred_fallthru
        _
      // Predicated region
      $region29: #{clstm_forward.1} parent=11 // pred_check
        %p324 = pneg %p199
      $region30: #{clstm_forward.1} parent=11 // pred_check_branch
        %326 = sbr.rel (%p324) target = $region32
      $region31: #{clstm_forward.1} parent=11 // pred_region
        _
      $region32: #{clstm_forward.1} parent=11 // pred_fallthru
        _
      // Predicated region
      $region33: #{clstm_forward.1} parent=11 // pred_check
        %p327 = pneg %p220
      $region34: #{clstm_forward.1} parent=11 // pred_check_branch
        %329 = sbr.rel (%p327) target = $region36
      $region35: #{clstm_forward.1} parent=11 // pred_region
        _
      $region36: #{clstm_forward.1} parent=11 // pred_fallthru
        _
      // Predicated region
      $region37: #{clstm_forward.1} parent=11 // pred_check
        %p330 = pneg %p241
      $region38: #{clstm_forward.1} parent=11 // pred_check_branch
        %332 = sbr.rel (%p330) target = $region40
      $region39: #{clstm_forward.1} parent=11 // pred_region
        _
      $region40: #{clstm_forward.1} parent=11 // pred_fallthru
        _
      // Predicated region
      $region41: #{clstm_forward.1} parent=11 // pred_check
        %p333 = pneg %p262
      $region42: #{clstm_forward.1} parent=11 // pred_check_branch
        %335 = sbr.rel (%p333) target = $region44
      $region43: #{clstm_forward.1} parent=11 // pred_region
        _
      $region44: #{clstm_forward.1} parent=11 // pred_fallthru
        _
    $region12: #{clstm_forward.1} parent=5 // pred_fallthru
      _
    %p336 = scmp.lt.s32.totalorder %s16, 2
    // Predicated region
    $region45: #{clstm_forward.1} parent=5 // pred_check
      %p337 = pneg %p336
    $region46: #{clstm_forward.1} parent=5 // pred_check_branch
      %339 = sbr.rel (%p337) target = $region48
    $region47: #{clstm_forward.1} parent=5 // pred_region
      // Predicated region
      $region49: #{clstm_forward.1} parent=47 // pred_check
        %p340 = pneg %p83
      $region50: #{clstm_forward.1} parent=47 // pred_check_branch
        %342 = sbr.rel (%p340) target = $region52
      $region51: #{clstm_forward.1} parent=47 // pred_region
        %p343 = scmp.lt.s32.totalorder %s24, 1
        %s344 = scalar_select %p343, %s24, 1
        %s345 = smul.addr %s344, 10
        %s346 = smul.addr %s345, 4
        %s347 = scalar_lea.vmem %s1, %s346
      $region52: #{clstm_forward.1} parent=47 // pred_fallthru
        _
      // Predicated region
      $region53: #{clstm_forward.1} parent=47 // pred_check
        %p348 = pneg %p109
      $region54: #{clstm_forward.1} parent=47 // pred_check_branch
        %350 = sbr.rel (%p348) target = $region56
      $region55: #{clstm_forward.1} parent=47 // pred_region
        %p351 = scmp.lt.s32.totalorder %s24, 1
        %s352 = scalar_select %p351, %s24, 1
        %s353 = scalar_lea.vmem %s2, %s352
      $region56: #{clstm_forward.1} parent=47 // pred_fallthru
        _
    $region48: #{clstm_forward.1} parent=5 // pred_fallthru
      _
    %p354 = scmp.le.s32.totalorder 1, %s16
    %p355 = scmp.lt.s32.totalorder %s16, 3
    %p356 = pnand %p354, %p355
    %p357 = pneg %p356
    // Predicated region
    $region57: #{clstm_forward.1} parent=5 // pred_check
      _
    $region58: #{clstm_forward.1} parent=5 // pred_check_branch
      %359 = sbr.rel (%p356) target = $region60
    $region59: #{clstm_forward.1} parent=5 // pred_region
      %s360 = ssub.s32 %s16, 1
      %s361 = smul.u32 2, %s28
      %p362 = scmp.lt.s32.totalorder %s361, 1
      %s363 = scalar_select %p362, %s361, 1
      %p364 = scmp.lt.s32.totalorder %s26, 0
      %s365 = scalar_select %p364, %s26, 0
      %s366 = sadd.s32 %s365, %s363
      %s367 = smul.addr %s366, 4
      %s368 = scalar_lea.vmem %s0, %s367
      %p369 = pneg %p63
      %p370 = pneg %p60
      %p371 = scmp.lt.s32.totalorder %s27, 1
      %s372 = scalar_select %p371, %s27, 1
      %s373 = smul.addr %s372, 10
      %s374 = smul.addr %s373, 4
      %s375 = scalar_lea.vmem %s1, %s374
      %p376 = pneg %p89
      %p377 = pneg %p86
      %p378 = scmp.lt.s32.totalorder %s27, 1
      %s379 = scalar_select %p378, %s27, 1
      %s380 = scalar_lea.vmem %s2, %s379
      %p381 = pneg %p115
      %p382 = pneg %p112
      %p383 = pneg %p136
      %p384 = pneg %p133
      %p385 = pneg %p157
      %p386 = pneg %p154
      %p387 = pneg %p178
      %p388 = pneg %p175
      %p389 = pneg %p199
      %p390 = pneg %p196
      %p391 = pneg %p220
      %p392 = pneg %p217
      %p393 = pneg %p241
      %p394 = pneg %p238
      %p395 = pneg %p262
      %p396 = pneg %p259
      %p397 = pneg %p288
      %p398 = pneg %p285
      %p399 = scmp.lt.s32.totalorder %s26, 0
      %s400 = scalar_select %p399, %s26, 0
      %s401 = smul.addr %s400, 8
      %s402 = scalar_lea.vmem %s10, %s401
      %s403 = smul.u32 2, %s28
      %p404 = scmp.lt.s32.totalorder %s403, 1
      %s405 = scalar_select %p404, %s403, 1
      %p406 = scmp.lt.s32.totalorder %s26, 0
      %s407 = scalar_select %p406, %s26, 0
      %s408 = sadd.s32 %s407, %s405
      %s409 = smul.addr %s408, 4
      %s410 = scalar_lea.vmem %s0, %s409
      %s411 = smul.u32 2, %s28
      %p412 = scmp.lt.s32.totalorder %s27, 1
      %s413 = scalar_select %p412, %s27, 1
      %s414 = smul.addr %s413, 10
      %s415 = smul.addr %s414, 4
      %s416 = scalar_lea.vmem %s1, %s415
      %p417 = scmp.lt.s32.totalorder %s27, 1
      %s418 = scalar_select %p417, %s27, 1
      %s419 = scalar_lea.vmem %s2, %s418
      %p420 = scmp.lt.s32.totalorder %s26, 0
      %s421 = scalar_select %p420, %s26, 0
      %s422 = smul.addr %s421, 8
      %s423 = scalar_lea.vmem %s10, %s422
      %p425 = scmp.eq.s32.totalorder %s27, 0
      %p426 = scmp.eq.s32.totalorder %s28, 0
      %p427 = pnand %p425, %p426
      %p428 = pneg %p427
      // Predicated region
      $region61: #{clstm_forward.1} parent=59 // pred_check
        _
      $region62: #{clstm_forward.1} parent=59 // pred_check_branch
        %430 = sbr.rel (%p427) target = $region64
      $region63: #{clstm_forward.1} parent=59 // pred_region
        %vm431 = vcmask 261120
        %432 = vst.msk [vmem:[#allocation2] sm:$0xff] %vm431, 0.0
        %433 = vst.msk [vmem:[#allocation3] sm:$0xff] %vm431, 0.0
        %434 = vst.msk [vmem:[#allocation4] sm:$0xff] %vm431, -inf
      $region64: #{clstm_forward.1} parent=59 // pred_fallthru
        _
      %v435 = vld [vmem:[%s410] sm:$0xf]
      %v436 = vld [vmem:[%s410 + $0x4] sm:$0xf]
      %v437 = vld [vmem:[%s416] sm:$0xf]
      %v438 = vld [vmem:[%s416 + $0x4] sm:$0xf]
      %v439 = vld [vmem:[%s416 + $0x8] sm:$0xf]
      %v440 = vld [vmem:[%s416 + $0xc] sm:$0xf]
      %v441 = vld [vmem:[%s416 + $0x10] sm:$0xf]
      %v442 = vld [vmem:[%s416 + $0x14] sm:$0xf]
      %v443 = vld [vmem:[%s416 + $0x18] sm:$0xf]
      %v444 = vld [vmem:[%s416 + $0x1c] sm:$0xf]
      %v445 = vld [vmem:[%s416 + $0x20] sm:$0xf]
      %v446 = vld [vmem:[%s416 + $0x24] sm:$0xf]
      %v447 = vld [vmem:[%s419] sm:$0x1]
      %v449 = vlaneseq
      %v450 = vshrl.u32 %v449, 7
      %v451 = vsub.s32 0, %v450
      %v452 = vrot.slane %v447, %v451
      %v456 = vunpack.c.l.b16 %v435
      %v457 = vunpack.c.l.b16 %v436
      %v458 = vpack.c.b16 %v457, %v456
      %v469 = vunpack.c.l.b16 %v437
      %v470 = vunpack.c.l.b16 %v438
      %v471 = vunpack.c.l.b16 %v439
      %v472 = vunpack.c.l.b16 %v440
      %v473 = vunpack.c.l.b16 %v441
      %v474 = vunpack.c.l.b16 %v442
      %v475 = vunpack.c.l.b16 %v443
      %v476 = vunpack.c.l.b16 %v444
      %v477 = vunpack.c.l.b16 %v445
      %v478 = vunpack.c.l.b16 %v446
      %v479 = vpack.c.b16 %v470, %v469
      %v480 = vpack.c.b16 %v472, %v471
      %v481 = vpack.c.b16 %v474, %v473
      %v482 = vpack.c.b16 %v476, %v475
      %v483 = vpack.c.b16 %v478, %v477
      %vm489 = vcmask 654336
      %v491 = vsel %vm489, %v458, 0
      %493 = vmatprep.subr.bf16.mxu0 0
      %494 = vmatpush1.bf16.msra.mxu0 %v479
      %495 = vmatprep.subr.bf16.mxu0 0
      %496 = vmatpush1.bf16.msra.mxu0 %v480
      %497 = vmatprep.subr.bf16.mxu0 0
      %498 = vmatpush1.bf16.msra.mxu0 %v481
      %499 = vmatprep.subr.bf16.mxu0 0
      %500 = vmatpush1.bf16.msra.mxu0 %v482
      %501 = vmatprep.subr.bf16.mxu0 0
      %502 = vmatpush1.bf16.msra.mxu0 %v483
      %503 = vmatprep.subr.bf16.mxu0 0
      %504 = vmatpush1.bf16.msra.mxu0 0
      %505 = vmatprep.subr.bf16.mxu0 0
      %506 = vmatpush1.bf16.msra.mxu0 0
      %507 = vmatprep.subr.bf16.mxu0 0
      %508 = vmatpush1.bf16.msra.mxu0 0
      %509 = vmatprep.subr.bf16.mxu0 0
      %510 = vmatpush1.bf16.msra.mxu0 0
      %511 = vmatprep.subr.bf16.mxu0 0
      %512 = vmatpush1.bf16.msra.mxu0 0
      %513 = vmatprep.subr.bf16.mxu0 0
      %514 = vmatpush1.bf16.msra.mxu0 0
      %515 = vmatprep.subr.bf16.mxu0 0
      %516 = vmatpush1.bf16.msra.mxu0 0
      %517 = vmatprep.subr.bf16.mxu0 0
      %518 = vmatpush1.bf16.msra.mxu0 0
      %519 = vmatprep.subr.bf16.mxu0 0
      %520 = vmatpush1.bf16.msra.mxu0 0
      %521 = vmatprep.subr.bf16.mxu0 0
      %522 = vmatpush1.bf16.msra.mxu0 0
      %523 = vmatprep.subr.bf16.mxu0 0
      %524 = vmatpush1.bf16.msra.mxu0 0
      %525 = vmatprep.mubr.bf16.mxu0 0
      %526 = vmatmul.mubr.bf16.gmra.mrb[0].mxu0 %v491
      %v527 = vpop.f32.mrb[0].mxu0
      %v528 = vadd.f32 %v452, %v527
      %v529 = vpop.f32.mrb[0].mxu0
      %v530 = vpop.f32.mrb[0].mxu0
      %v531 = vadd.f32 %v452, %v530
      %v532 = vpop.f32.mrb[0].mxu0
      %533 = vdwg.mxu0
      %v534 = vmax.f32 %v528, 0.0
      %v535 = vmax.f32 %v531, 0.0
      %v536 = vpack.c.bf16 %v535, %v534
      %v537 = vld [vmem:[%s3] sm:$0xf]
      %v538 = vld [vmem:[%s3 + $0x4] sm:$0xf]
      %v539 = vld [vmem:[%s4] sm:$0x1]
      %v541 = vlaneseq
      %v542 = vshrl.u32 %v541, 7
      %v543 = vsub.s32 0, %v542
      %v544 = vrot.slane %v539, %v543
      %v548 = vunpack.c.l.b16 %v537
      %v549 = vunpack.c.l.b16 %v538
      %v550 = vpack.c.b16 %v549, %v548
      %vm552 = vcmask 130048
      %v554 = vsel %vm552, %v536, 0
      %556 = vmatprep.subr.bf16.mxu0 0
      %557 = vmatpush1.bf16.msra.mxu0 %v550
      %558 = vmatprep.subr.bf16.mxu0 0
      %559 = vmatpush1.bf16.msra.mxu0 0
      %560 = vmatprep.subr.bf16.mxu0 0
      %561 = vmatpush1.bf16.msra.mxu0 0
      %562 = vmatprep.subr.bf16.mxu0 0
      %563 = vmatpush1.bf16.msra.mxu0 0
      %564 = vmatprep.subr.bf16.mxu0 0
      %565 = vmatpush1.bf16.msra.mxu0 0
      %566 = vmatprep.subr.bf16.mxu0 0
      %567 = vmatpush1.bf16.msra.mxu0 0
      %568 = vmatprep.subr.bf16.mxu0 0
      %569 = vmatpush1.bf16.msra.mxu0 0
      %570 = vmatprep.subr.bf16.mxu0 0
      %571 = vmatpush1.bf16.msra.mxu0 0
      %572 = vmatprep.subr.bf16.mxu0 0
      %573 = vmatpush1.bf16.msra.mxu0 0
      %574 = vmatprep.subr.bf16.mxu0 0
      %575 = vmatpush1.bf16.msra.mxu0 0
      %576 = vmatprep.subr.bf16.mxu0 0
      %577 = vmatpush1.bf16.msra.mxu0 0
      %578 = vmatprep.subr.bf16.mxu0 0
      %579 = vmatpush1.bf16.msra.mxu0 0
      %580 = vmatprep.subr.bf16.mxu0 0
      %581 = vmatpush1.bf16.msra.mxu0 0
      %582 = vmatprep.subr.bf16.mxu0 0
      %583 = vmatpush1.bf16.msra.mxu0 0
      %584 = vmatprep.subr.bf16.mxu0 0
      %585 = vmatpush1.bf16.msra.mxu0 0
      %586 = vmatprep.subr.bf16.mxu0 0
      %587 = vmatpush1.bf16.msra.mxu0 0
      %588 = vmatprep.mubr.bf16.mxu0 0
      %589 = vmatmul.mubr.bf16.gmra.mrb[0].mxu0 %v554
      %v590 = vpop.f32.mrb[0].mxu0
      %v591 = vadd.f32 %v544, %v590
      %v592 = vpop.f32.mrb[0].mxu0
      %v593 = vpop.f32.mrb[0].mxu0
      %v594 = vadd.f32 %v544, %v593
      %v595 = vpop.f32.mrb[0].mxu0
      %596 = vdwg.mxu0
      %597 = vst [vmem:[#allocation5] sm:$0xff] %v591
      %598 = vst [vmem:[#allocation5 + $0x8] sm:$0xff] %v594
      %v599 = vld [vmem:[%s5] sm:$0xf]
      %v600 = vld [vmem:[%s5 + $0x4] sm:$0xf]
      %v601 = vld [vmem:[%s5 + $0x8] sm:$0xf]
      %v602 = vld [vmem:[%s5 + $0xc] sm:$0xf]
      %v603 = vld [vmem:[#allocation2] sm:$0xff]
      %v604 = vld [vmem:[#allocation3] sm:$0xff]
      %v605 = vld [vmem:[#allocation4] sm:$0xff]
      %v606 = vld [vmem:[#allocation5] sm:$0xff]
      %v607 = vpack.c.bf16 %v603, %v603
      %v612 = vunpack.c.l.b16 %v599
      %v613 = vunpack.c.l.b16 %v600
      %v614 = vunpack.c.l.b16 %v601
      %v615 = vunpack.c.l.b16 %v602
      %v616 = vpack.c.b16 %v613, %v612
      %v617 = vpack.c.b16 %v615, %v614
      %vm620 = vcmask 261120
      %v622 = vsel %vm620, %v607, 0
      %624 = vmatprep.subr.bf16.mxu0 0
      %625 = vmatpush1.bf16.msra.mxu0 %v616
      %626 = vmatprep.subr.bf16.mxu0 0
      %627 = vmatpush1.bf16.msra.mxu0 %v617
      %628 = vmatprep.subr.bf16.mxu0 0
      %629 = vmatpush1.bf16.msra.mxu0 0
      %630 = vmatprep.subr.bf16.mxu0 0
      %631 = vmatpush1.bf16.msra.mxu0 0
      %632 = vmatprep.subr.bf16.mxu0 0
      %633 = vmatpush1.bf16.msra.mxu0 0
      %634 = vmatprep.subr.bf16.mxu0 0
      %635 = vmatpush1.bf16.msra.mxu0 0
      %636 = vmatprep.subr.bf16.mxu0 0
      %637 = vmatpush1.bf16.msra.mxu0 0
      %638 = vmatprep.subr.bf16.mxu0 0
      %639 = vmatpush1.bf16.msra.mxu0 0
      %640 = vmatprep.subr.bf16.mxu0 0
      %641 = vmatpush1.bf16.msra.mxu0 0
      %642 = vmatprep.subr.bf16.mxu0 0
      %643 = vmatpush1.bf16.msra.mxu0 0
      %644 = vmatprep.subr.bf16.mxu0 0
      %645 = vmatpush1.bf16.msra.mxu0 0
      %646 = vmatprep.subr.bf16.mxu0 0
      %647 = vmatpush1.bf16.msra.mxu0 0
      %648 = vmatprep.subr.bf16.mxu0 0
      %649 = vmatpush1.bf16.msra.mxu0 0
      %650 = vmatprep.subr.bf16.mxu0 0
      %651 = vmatpush1.bf16.msra.mxu0 0
      %652 = vmatprep.subr.bf16.mxu0 0
      %653 = vmatpush1.bf16.msra.mxu0 0
      %654 = vmatprep.subr.bf16.mxu0 0
      %655 = vmatpush1.bf16.msra.mxu0 0
      %656 = vmatprep.mubr.bf16.mxu0 0
      %657 = vmatmul.mubr.bf16.gmra.mrb[0].mxu0 %v622
      %v658 = vpop.f32.mrb[0].mxu0
      %v659 = vadd.f32 0.0, %v658
      %v660 = vpop.f32.mrb[0].mxu0
      %v661 = vpop.f32.mrb[0].mxu0
      %v662 = vpop.f32.mrb[0].mxu0
      %663 = vdwg.mxu0
      %v664 = vadd.f32 %v606, %v659
      %v665 = vxor.u32 %v664, 2147483648
      %v666 = vmul.f32 %v665, 1.442695
      %v667 = vpow.pop %v666
      %v668 = vadd.f32 %v667, 1.0
      %v669 = vrcp.pop %v668
      %v670 = vmul.f32 1.0, %v669
      %v671 = vtanh.pop %v664
      %673 = vrot.lane.b32.xlu0 %v604, 32
      %v674 = vpop.permute.xlu0 %673
      %v676 = vmul.f32 %v670, %v674
      %678 = vrot.lane.b32.xlu0 %v671, 32
      %v679 = vpop.permute.xlu0 %678
      %v681 = vmul.f32 %v670, %v679
      %683 = vrot.lane.b32.xlu0 %v681, 32
      %v684 = vpop.permute.xlu0 %683
      %v686 = vadd.f32 %v676, %v684
      %v687 = vtanh.pop %v686
      %689 = vrot.lane.b32.xlu0 %v687, 32
      %v690 = vpop.permute.xlu0 %689
      %v692 = vmul.f32 %v670, %v690
      %694 = vrot.lane.b32.xlu0 %v692, 64
      %v695 = vpop.permute.xlu0 %694
      %v697 = vmax.f32 %v605, %v695
      %s698 = scalar_lea.vmem [#allocation5], 8
      %v699 = vld [vmem:[%s698] sm:$0xff]
      %v700 = vpack.c.bf16 %v692, %v692
      %702 = vrot.lane.b32.xlu0 %v700, 64
      %v703 = vpop.permute.xlu0 %702
      %v705 = vsel %vm620, %v703, 0
      %707 = vmatprep.subr.bf16.mxu0 0
      %708 = vmatpush1.bf16.msra.mxu0 %v616
      %709 = vmatprep.subr.bf16.mxu0 0
      %710 = vmatpush1.bf16.msra.mxu0 %v617
      %711 = vmatprep.subr.bf16.mxu0 0
      %712 = vmatpush1.bf16.msra.mxu0 0
      %713 = vmatprep.subr.bf16.mxu0 0
      %714 = vmatpush1.bf16.msra.mxu0 0
      %715 = vmatprep.subr.bf16.mxu0 0
      %716 = vmatpush1.bf16.msra.mxu0 0
      %717 = vmatprep.subr.bf16.mxu0 0
      %718 = vmatpush1.bf16.msra.mxu0 0
      %719 = vmatprep.subr.bf16.mxu0 0
      %720 = vmatpush1.bf16.msra.mxu0 0
      %721 = vmatprep.subr.bf16.mxu0 0
      %722 = vmatpush1.bf16.msra.mxu0 0
      %723 = vmatprep.subr.bf16.mxu0 0
      %724 = vmatpush1.bf16.msra.mxu0 0
      %725 = vmatprep.subr.bf16.mxu0 0
      %726 = vmatpush1.bf16.msra.mxu0 0
      %727 = vmatprep.subr.bf16.mxu0 0
      %728 = vmatpush1.bf16.msra.mxu0 0
      %729 = vmatprep.subr.bf16.mxu0 0
      %730 = vmatpush1.bf16.msra.mxu0 0
      %731 = vmatprep.subr.bf16.mxu0 0
      %732 = vmatpush1.bf16.msra.mxu0 0
      %733 = vmatprep.subr.bf16.mxu0 0
      %734 = vmatpush1.bf16.msra.mxu0 0
      %735 = vmatprep.subr.bf16.mxu0 0
      %736 = vmatpush1.bf16.msra.mxu0 0
      %737 = vmatprep.subr.bf16.mxu0 0
      %738 = vmatpush1.bf16.msra.mxu0 0
      %739 = vmatprep.mubr.bf16.mxu0 0
      %740 = vmatmul.mubr.bf16.gmra.mrb[0].mxu0 %v705
      %v741 = vpop.f32.mrb[0].mxu0
      %v742 = vadd.f32 0.0, %v741
      %v743 = vpop.f32.mrb[0].mxu0
      %v744 = vpop.f32.mrb[0].mxu0
      %v745 = vpop.f32.mrb[0].mxu0
      %746 = vdwg.mxu0
      %v747 = vadd.f32 %v699, %v742
      %v748 = vxor.u32 %v747, 2147483648
      %v749 = vmul.f32 %v748, 1.442695
      %v750 = vpow.pop %v749
      %v751 = vadd.f32 %v750, 1.0
      %v752 = vrcp.pop %v751
      %v753 = vmul.f32 1.0, %v752
      %v754 = vtanh.pop %v747
      %v755 = vmul.f32 %v753, %v686
      %757 = vrot.lane.b32.xlu0 %v754, 32
      %v758 = vpop.permute.xlu0 %757
      %v760 = vmul.f32 %v753, %v758
      %762 = vrot.lane.b32.xlu0 %v760, 32
      %v763 = vpop.permute.xlu0 %762
      %v765 = vadd.f32 %v755, %v763
      %v766 = vtanh.pop %v765
      %768 = vrot.lane.b32.xlu0 %v766, 32
      %v769 = vpop.permute.xlu0 %768
      %v771 = vmul.f32 %v753, %v769
      %773 = vrot.lane.b32.xlu0 %v771, 64
      %v774 = vpop.permute.xlu0 %773
      %v776 = vmax.f32 %v697, %v774
      %777 = vst.msk [vmem:[#allocation2] sm:$0xff] %vm620, %v774
      %779 = vrot.lane.b32.xlu0 %v765, 96
      %v780 = vpop.permute.xlu0 %779
      %782 = vst.msk [vmem:[#allocation3] sm:$0xff] %vm620, %v780
      %783 = vst.msk [vmem:[#allocation4] sm:$0xff] %vm620, %v776
      %p784 = scmp.eq.s32.totalorder %s27, 1
      %p785 = pnand %p784, %p426
      %p786 = pneg %p785
      // Predicated region
      $region65: #{clstm_forward.1} parent=59 // pred_check
        _
      $region66: #{clstm_forward.1} parent=59 // pred_check_branch
        %788 = sbr.rel (%p785) target = $region68
      $region67: #{clstm_forward.1} parent=59 // pred_region
        %v789 = vtanh.pop %v776
        %v790 = vpack.c.bf16 %v789, %v789
        %v791 = vld [vmem:[%s6] sm:$0xf]
        %v792 = vld [vmem:[%s6 + $0x4] sm:$0xf]
        %v793 = vld [vmem:[%s6 + $0x8] sm:$0xf]
        %v794 = vld [vmem:[%s6 + $0xc] sm:$0xf]
        %v795 = vld [vmem:[%s7] sm:$0x1]
        %v797 = vlaneseq
        %v798 = vshrl.u32 %v797, 7
        %v799 = vsub.s32 0, %v798
        %v800 = vrot.slane %v795, %v799
        %v806 = vunpack.c.l.b16 %v791
        %v807 = vunpack.c.l.b16 %v792
        %v808 = vunpack.c.l.b16 %v793
        %v809 = vunpack.c.l.b16 %v794
        %v810 = vpack.c.b16 %v807, %v806
        %v811 = vpack.c.b16 %v809, %v808
        %v815 = vsel %vm620, %v790, 0
        %817 = vmatprep.subr.bf16.mxu0 0
        %818 = vmatpush1.bf16.msra.mxu0 %v810
        %819 = vmatprep.subr.bf16.mxu0 0
        %820 = vmatpush1.bf16.msra.mxu0 %v811
        %821 = vmatprep.subr.bf16.mxu0 0
        %822 = vmatpush1.bf16.msra.mxu0 0
        %823 = vmatprep.subr.bf16.mxu0 0
        %824 = vmatpush1.bf16.msra.mxu0 0
        %825 = vmatprep.subr.bf16.mxu0 0
        %826 = vmatpush1.bf16.msra.mxu0 0
        %827 = vmatprep.subr.bf16.mxu0 0
        %828 = vmatpush1.bf16.msra.mxu0 0
        %829 = vmatprep.subr.bf16.mxu0 0
        %830 = vmatpush1.bf16.msra.mxu0 0
        %831 = vmatprep.subr.bf16.mxu0 0
        %832 = vmatpush1.bf16.msra.mxu0 0
        %833 = vmatprep.subr.bf16.mxu0 0
        %834 = vmatpush1.bf16.msra.mxu0 0
        %835 = vmatprep.subr.bf16.mxu0 0
        %836 = vmatpush1.bf16.msra.mxu0 0
        %837 = vmatprep.subr.bf16.mxu0 0
        %838 = vmatpush1.bf16.msra.mxu0 0
        %839 = vmatprep.subr.bf16.mxu0 0
        %840 = vmatpush1.bf16.msra.mxu0 0
        %841 = vmatprep.subr.bf16.mxu0 0
        %842 = vmatpush1.bf16.msra.mxu0 0
        %843 = vmatprep.subr.bf16.mxu0 0
        %844 = vmatpush1.bf16.msra.mxu0 0
        %845 = vmatprep.subr.bf16.mxu0 0
        %846 = vmatpush1.bf16.msra.mxu0 0
        %847 = vmatprep.subr.bf16.mxu0 0
        %848 = vmatpush1.bf16.msra.mxu0 0
        %849 = vmatprep.mubr.bf16.mxu0 0
        %850 = vmatmul.mubr.bf16.gmra.mrb[0].mxu0 %v815
        %v851 = vpop.f32.mrb[0].mxu0
        %v852 = vadd.f32 %v800, %v851
        %v853 = vpop.f32.mrb[0].mxu0
        %v854 = vpop.f32.mrb[0].mxu0
        %v855 = vpop.f32.mrb[0].mxu0
        %856 = vdwg.mxu0
        %v857 = vtanh.pop %v852
        %v858 = vpack.c.bf16 %v857, %v857
        %v859 = vld [vmem:[%s8] sm:$0xf]
        %v860 = vld [vmem:[%s8 + $0x4] sm:$0xf]
        %v861 = vld [vmem:[%s9] sm:$0x1]
        %v863 = vlaneseq
        %v864 = vshrl.u32 %v863, 7
        %v865 = vsub.s32 0, %v864
        %v866 = vrot.slane %v861, %v865
        %v870 = vunpack.c.l.b16 %v859
        %v871 = vunpack.c.l.b16 %v860
        %v872 = vpack.c.b16 %v871, %v870
        %v875 = vsel %vm552, %v858, 0
        %877 = vmatprep.subr.bf16.mxu0 0
        %878 = vmatpush1.bf16.msra.mxu0 %v872
        %879 = vmatprep.subr.bf16.mxu0 0
        %880 = vmatpush1.bf16.msra.mxu0 0
        %881 = vmatprep.subr.bf16.mxu0 0
        %882 = vmatpush1.bf16.msra.mxu0 0
        %883 = vmatprep.subr.bf16.mxu0 0
        %884 = vmatpush1.bf16.msra.mxu0 0
        %885 = vmatprep.subr.bf16.mxu0 0
        %886 = vmatpush1.bf16.msra.mxu0 0
        %887 = vmatprep.subr.bf16.mxu0 0
        %888 = vmatpush1.bf16.msra.mxu0 0
        %889 = vmatprep.subr.bf16.mxu0 0
        %890 = vmatpush1.bf16.msra.mxu0 0
        %891 = vmatprep.subr.bf16.mxu0 0
        %892 = vmatpush1.bf16.msra.mxu0 0
        %893 = vmatprep.subr.bf16.mxu0 0
        %894 = vmatpush1.bf16.msra.mxu0 0
        %895 = vmatprep.subr.bf16.mxu0 0
        %896 = vmatpush1.bf16.msra.mxu0 0
        %897 = vmatprep.subr.bf16.mxu0 0
        %898 = vmatpush1.bf16.msra.mxu0 0
        %899 = vmatprep.subr.bf16.mxu0 0
        %900 = vmatpush1.bf16.msra.mxu0 0
        %901 = vmatprep.subr.bf16.mxu0 0
        %902 = vmatpush1.bf16.msra.mxu0 0
        %903 = vmatprep.subr.bf16.mxu0 0
        %904 = vmatpush1.bf16.msra.mxu0 0
        %905 = vmatprep.subr.bf16.mxu0 0
        %906 = vmatpush1.bf16.msra.mxu0 0
        %907 = vmatprep.subr.bf16.mxu0 0
        %908 = vmatpush1.bf16.msra.mxu0 0
        %909 = vmatprep.mubr.bf16.mxu0 0
        %910 = vmatmul.mubr.bf16.gmra.mrb[0].mxu0 %v875
        %v911 = vpop.f32.mrb[0].mxu0
        %v912 = vadd.f32 %v866, %v911
        %v913 = vpop.f32.mrb[0].mxu0
        %v914 = vpop.f32.mrb[0].mxu0
        %v915 = vpop.f32.mrb[0].mxu0
        %916 = vdwg.mxu0
        %vm917 = vcmask 31744
        %918 = vst.msk [vmem:[%s423] sm:$0xff] %vm917, %v912
      $region68: #{clstm_forward.1} parent=59 // pred_fallthru
        _
      %p919 = scmp.lt.s32.totalorder %s26, 0
      %s920 = scalar_select %p919, %s26, 0
      %s921 = smul.addr %s920, 8
      %s922 = scalar_lea.vmem %s10, %s921
      // Predicated region
      $region69: #{clstm_forward.1} parent=59 // pred_check
        %p923 = pneg %p285
      $region70: #{clstm_forward.1} parent=59 // pred_check_branch
        %925 = sbr.rel (%p923) target = $region72
      $region71: #{clstm_forward.1} parent=59 // pred_region
        _
      $region72: #{clstm_forward.1} parent=59 // pred_fallthru
        _
      // Predicated region
      $region73: #{clstm_forward.1} parent=59 // pred_check
        %p926 = pneg %p285
      $region74: #{clstm_forward.1} parent=59 // pred_check_branch
        %928 = sbr.rel (%p926) target = $region76
      $region75: #{clstm_forward.1} parent=59 // pred_region
        %p929 = scmp.lt.s32.totalorder %s26, 0
        %s930 = scalar_select %p929, %s26, 0
        %s931 = smul.addr %s930, 8
        %s932 = scalar_lea.vmem %s10, %s931
      $region76: #{clstm_forward.1} parent=59 // pred_fallthru
        _
    $region60: #{clstm_forward.1} parent=5 // pred_fallthru
      _
    %p933 = scmp.le.s32.totalorder 2, %s16
    // Predicated region
    $region77: #{clstm_forward.1} parent=5 // pred_check
      %p934 = pneg %p933
    $region78: #{clstm_forward.1} parent=5 // pred_check_branch
      %936 = sbr.rel (%p934) target = $region80
    $region79: #{clstm_forward.1} parent=5 // pred_region
      %s937 = ssub.s32 %s16, 2
    $region80: #{clstm_forward.1} parent=5 // pred_fallthru
      _
  $region6: #{clstm_forward.1} parent=0 // loop_footer
    %s20 = sadd.s32 1, %s16
  $region7: #{clstm_forward.1} parent=0 // loop_footer_branch
    %15 = sbr.rel target = $region3
  $region8: #{clstm_forward.1} parent=0 // loop_exit
    _

</llo_original>
